<compile_context>
chip_gen: v5e
topology: v5e:2x2
jax: 0.10.0
libtpu: 0.0.40
codegen_flags: <defaults>
</compile_context>

<pallas_src>
import functools

import jax
import jax.numpy as jnp
from jax.experimental import pallas as pl
from jax.experimental.pallas import tpu as pltpu


# ---------------------------------------------------------------------------
# Helpers
# ---------------------------------------------------------------------------
def _vmem_cap_bytes():
    """Per-core VMEM capacity (fallback: 64 MiB = v7x per-TC size)."""
    try:
        return int(pltpu.get_tpu_info().vmem_capacity_bytes)
    except Exception:
        return 64 << 20


def _rep_spec(arr):
    """Whole array, replicated across the grid (weights / packed biases).

    pipeline_mode=Buffered(1): the block is grid-invariant, so a single VMEM copy
    suffices (no double-buffering of the ~16*H^2 bf16 weight footprint).
    """
    nd = arr.ndim
    return pl.BlockSpec(tuple(arr.shape), lambda *_, nd=nd: (0,) * nd,
                        pipeline_mode=pl.Buffered(1))


def _choose_bt(bsz, nt, Sk, H, enc_budget_bytes=8 << 20, max_rows=512):
    """Largest divisor of bsz whose row count / bf16 encoder block fit the budget."""
    best = 1
    for bt in range(1, bsz + 1):
        if bsz % bt or bt * nt > max_rows or bt * Sk * H * 2 > enc_budget_bytes:
            continue
        best = bt
    return best


def _choose_tile_sk(Sk, nt, d8, budget_bytes=8 << 20):
    """Largest multiple-of-8 Sk tile whose bf16 tanh tile fits the budget.

    Never exceeds the budget; the caller zero-pads Sk up to a tile multiple, so no
    divisibility of Sk (or of nt*tile) is required.
    """
    per_row = nt * d8 * 2 + d8 * 4            # bf16 tanh rows + fp32 m2 row
    t = min(Sk, max(8, budget_bytes // per_row))
    return max(8, (t // 8) * 8)


# ---------------------------------------------------------------------------
# Fused decoder layer kernel: self-attn + cross-attn + FFN (Bt batch rows / step)
# ---------------------------------------------------------------------------
def _decoder_layer_kernel(hs_ref, enc_ref, mask_ref,
                          s_wqkv, s_wo, c_wq, c_wkv, c_wo, f_w1, f_w2, vec_ref,
                          out_ref, *, num_heads, head_dim, eps):
    Bt, nt, H = hs_ref.shape
    I = f_w1.shape[1]
    nh, dh = num_heads, head_dim
    scale = 1.0 / float(dh) ** 0.5

    def vrow(r, n):                            # packed small operands, [1, n] fp32
        return vec_ref[r:r + 1, :n]

    s_bqkv, s_bo, s_g, s_b = vrow(0, 3 * H), vrow(1, H), vrow(2, H), vrow(3, H)
    c_bq, c_bkv, c_bo, c_g, c_b = (vrow(4, H), vrow(5, 2 * H), vrow(6, H),
                                   vrow(7, H), vrow(8, H))
    f_b1, f_b2, f_g, f_b = vrow(9, I), vrow(10, H), vrow(11, H), vrow(12, H)

    def layer_norm(y, g, b):
        mean = jnp.mean(y, axis=-1, keepdims=True)
        var = jnp.mean((y - mean) ** 2, axis=-1, keepdims=True)
        return (y - mean) * jax.lax.rsqrt(var + eps) * g + b

    def attend(q, kv, add_mask):
        # q: [nt, H] fp32, kv: [Skv, 2H] fp32 (K | V), add_mask: [Mq, Skv] or None
        qb = (q * scale).astype(jnp.bfloat16)
        kvb = kv.astype(jnp.bfloat16)
        # TODO(synk): replace the per-head loop with a head-batched dot_general once
        #             a leading-batch-dim 3-D layout is plumbed (removes relayouts).
        ctxs = []
        for h in range(nh):
            lo = h * dh
            k_h = kvb[:, lo:lo + dh]
            v_h = kvb[:, H + lo:H + lo + dh]
            s = jax.lax.dot_general(qb[:, lo:lo + dh], k_h,
                                    (((1,), (1,)), ((), ())),
                                    preferred_element_type=jnp.float32)  # [nt, Skv]
            if add_mask is not None:
                s = s + add_mask
            s = s - jnp.max(s, axis=-1, keepdims=True)
            p = jnp.exp(s)
            p = p * pl.reciprocal(jnp.sum(p, axis=-1, keepdims=True), approx=True)
            ctxs.append(jnp.dot(p.astype(jnp.bfloat16), v_h,
                                preferred_element_type=jnp.float32))     # [nt, dh]
        return jnp.concatenate(ctxs, axis=-1)                            # [nt, H]

    # Load the whole (Bt, nt, H) query block; every projection / FFN matmul runs
    # with Bt*nt rows so the MXU M dimension is well filled.
    x = hs_ref[...].astype(jnp.float32).reshape(Bt * nt, H)

    # ---- self attention: fused q|k|v projection over all rows ----
    qkv = jnp.dot(x.astype(jnp.bfloat16), s_wqkv[...],
                  preferred_element_type=jnp.float32) + s_bqkv           # [Bt*nt, 3H]
    ctxs = []
    for b in range(Bt):
        blk = qkv[b * nt:(b + 1) * nt]
        ctxs.append(attend(blk[:, :H], blk[:, H:], None))
    ctx = jnp.concatenate(ctxs, axis=0)                                  # [Bt*nt, H]
    y = jnp.dot(ctx.astype(jnp.bfloat16), s_wo[...],
                preferred_element_type=jnp.float32) + s_bo + x
    x = layer_norm(y, s_g, s_b)

    # ---- cross attention: q over all rows, per-batch KV on the encoder ----
    q = jnp.dot(x.astype(jnp.bfloat16), c_wq[...],
                preferred_element_type=jnp.float32) + c_bq               # [Bt*nt, H]
    ctxs = []
    for b in range(Bt):
        kv = jnp.dot(enc_ref[b], c_wkv[...],
                     preferred_element_type=jnp.float32) + c_bkv         # [Sk, 2H]
        ctxs.append(attend(q[b * nt:(b + 1) * nt], kv,
                           mask_ref[b].astype(jnp.float32)))
    ctx = jnp.concatenate(ctxs, axis=0)
    y = jnp.dot(ctx.astype(jnp.bfloat16), c_wo[...],
                preferred_element_type=jnp.float32) + c_bo + x
    x = layer_norm(y, c_g, c_b)

    # ---- feed-forward ----
    h1 = jnp.dot(x.astype(jnp.bfloat16), f_w1[...],
                 preferred_element_type=jnp.float32) + f_b1
    # tanh-approximate GELU ("gelu_new").
    # TODO(synk): exact erf-based GELU if config.hidden_act == "gelu" is required.
    h1 = 0.5 * h1 * (1.0 + jnp.tanh(0.7978845608028654 *
                                    (h1 + 0.044715 * h1 * h1 * h1)))
    y = jnp.dot(h1.astype(jnp.bfloat16), f_w2[...],
                preferred_element_type=jnp.float32) + f_b2 + x
    out_ref[...] = layer_norm(y, f_g, f_b).reshape(Bt, nt, H).astype(out_ref.dtype)


def run_decoder_layer(hs, enc_bf16, mask, lp, num_heads, eps, bt):
    bsz, nt, H = hs.shape
    Sk = enc_bf16.shape[1]
    Mq = mask.shape[1]
    I = lp['f_w1'].shape[1]
    kernel = functools.partial(_decoder_layer_kernel, num_heads=num_heads,
                               head_dim=H // num_heads, eps=eps)
    args = (hs, enc_bf16, mask,
            lp['s_wqkv'], lp['s_wo'], lp['c_wq'], lp['c_wkv'], lp['c_wo'],
            lp['f_w1'], lp['f_w2'], lp['vec'])
    in_specs = ([pl.BlockSpec((bt, nt, H), lambda i: (i, 0, 0)),
                 pl.BlockSpec((bt, Sk, H), lambda i: (i, 0, 0)),
                 pl.BlockSpec((bt, Mq, Sk), lambda i: (i, 0, 0))]
                + [_rep_spec(a) for a in args[3:]])

    # VMEM budget: single-buffered weights + double-buffered activation blocks
    # + fp32 intermediates, clamped to the per-core capacity.
    w_bytes = sum(int(a.size) * a.dtype.itemsize for a in args[3:])
    blk_bytes = 2 * (2 * bt * nt * H * 2 + bt * Sk * H * 2 + bt * Mq * Sk * 4)
    inter_bytes = bt * nt * (9 * H + I) * 4
    limit = int(min(max(w_bytes + blk_bytes + inter_bytes + (8 << 20), 32 << 20),
                    _vmem_cap_bytes()))

    return pl.pallas_call(
        kernel,
        out_shape=jax.ShapeDtypeStruct((bsz, nt, H), jnp.bfloat16),
        grid=(bsz // bt,),
        in_specs=in_specs,
        out_specs=pl.BlockSpec((bt, nt, H), lambda i: (i, 0, 0)),
        compiler_params=pltpu.CompilerParams(
            dimension_semantics=("parallel",),
            vmem_limit_bytes=limit),
    )(*args)


# ---------------------------------------------------------------------------
# Biaffine metric + classifier kernel, tiled over Sk, lane-dense output
# ---------------------------------------------------------------------------
def _metric_cls_kernel(hs_ref, enc_ref, m1w, m1b, m2w, m2b, m3w, cls_w, cls_b,
                       logits_ref, cls_ref, m1_scr):
    j = pl.program_id(1)

    @pl.when(j == 0)
    def _():
        hs = hs_ref[0]                                               # [nt, H] bf16
        m1_scr[...] = (jnp.dot(hs, m1w[...],
                               preferred_element_type=jnp.float32)
                       + m1b[...]).astype(m1_scr.dtype)
        cls_ref[0] = (jnp.dot(hs, cls_w[...],
                              preferred_element_type=jnp.float32)
                      + cls_b[...]).astype(cls_ref.dtype)

    enc = enc_ref[0]                                                 # [T, H] bf16
    m2 = (jnp.dot(enc, m2w[...], preferred_element_type=jnp.float32)
          + m2b[...]).astype(jnp.bfloat16)                           # [T, 8H]
    m1 = m1_scr[...]                                                 # [nt, 8H] bf16

    # bf16 tanh tile (EUP bf16 path on v6e/v7x; halves the tile's VMEM footprint).
    t = jnp.tanh(m1[:, None, :] + m2[None, :, :])                    # [nt, T, 8H]
    nt, T, D8 = t.shape
    tf = t.reshape(nt * T, D8)
    # metric_3 rows 4..7 only (forward() returns only those channels);
    # contract 8H -> lane-dense [4, nt*T] output slab.
    r = jax.lax.dot_general(m3w[...], tf, (((1,), (1,)), ((), ())),
                            preferred_element_type=jnp.float32)
    logits_ref[0, 0] = r.astype(logits_ref.dtype)


def run_metric_and_class(hs_bf16, enc_bf16, p, tile_sk):
    bsz, nt, H = hs_bf16.shape
    Sk = enc_bf16.shape[1]
    D8 = p['m1_w'].shape[1]
    C = p['cls_w'].shape[1]

    Sk_pad = ((Sk + tile_sk - 1) // tile_sk) * tile_sk
    if Sk_pad != Sk:
        enc_bf16 = jnp.pad(enc_bf16, ((0, 0), (0, Sk_pad - Sk), (0, 0)))
    n_tiles = Sk_pad // tile_sk
    m3w4 = p['m3_w'][4:8]                      # only channels 4..7 are ever returned

    args = (hs_bf16, enc_bf16, p['m1_w'], p['m1_b'], p['m2_w'], p['m2_b'], m3w4,
            p['cls_w'], p['cls_b'])
    in_specs = ([pl.BlockSpec((1, nt, H), lambda b, j: (b, 0, 0)),
                 pl.BlockSpec((1, tile_sk, H), lambda b, j: (b, j, 0))]
                + [_rep_spec(a) for a in args[2:]])
    out_shapes = (jax.ShapeDtypeStruct((bsz, n_tiles, 4, nt * tile_sk), jnp.float32),
                  jax.ShapeDtypeStruct((bsz, nt, C), jnp.float32))
    out_specs = (pl.BlockSpec((1, 1, 4, nt * tile_sk), lambda b, j: (b, j, 0, 0)),
                 pl.BlockSpec((1, nt, C), lambda b, j: (b, 0, 0)))

    w_bytes = sum(int(a.size) * a.dtype.itemsize for a in args[2:])
    tile_bytes = nt * tile_sk * D8 * 2
    out_bytes = 2 * (4 * nt * tile_sk * 4 + nt * C * 4)
    limit = int(min(max(w_bytes + 3 * tile_bytes + out_bytes + (8 << 20), 32 << 20),
                    _vmem_cap_bytes()))

    raw, cls_logits = pl.pallas_call(
        _metric_cls_kernel,
        out_shape=out_shapes,
        grid=(bsz, n_tiles),
        in_specs=in_specs,
        out_specs=out_specs,
        scratch_shapes=[pltpu.VMEM((nt, D8), jnp.bfloat16)],
        compiler_params=pltpu.CompilerParams(
            dimension_semantics=("parallel", "arbitrary"),
            vmem_limit_bytes=limit),
    )(*args)

    # host-side layout plumbing: [bsz, nT, 4, nt*T] -> [bsz, 4, nt, Sk]
    logits = raw.reshape(bsz, n_tiles, 4, nt, tile_sk)
    logits = logits.transpose(0, 2, 3, 1, 4).reshape(bsz, 4, nt, Sk_pad)[..., :Sk]
    return logits, cls_logits


# ---------------------------------------------------------------------------
# Plain-JAX glue
# ---------------------------------------------------------------------------
def _layernorm_host(x, g, b, eps):
    mean = jnp.mean(x, axis=-1, keepdims=True)
    var = jnp.mean((x - mean) ** 2, axis=-1, keepdims=True)
    return (x - mean) * jax.lax.rsqrt(var + eps) * g + b


def build_additive_cross_mask(mask):
    """Compact additive mask [bsz, Mq, Sk] (Mq = 1 or nt), broadcast in-kernel."""
    mask = mask.astype(jnp.float32)
    if mask.ndim == 3:
        ext = mask                    # [bsz, Mq, Sk]
    elif mask.ndim == 2:
        ext = mask[:, None, :]        # [bsz, 1, Sk]
    else:
        raise ValueError("Wrong shape for encoder_attention_mask: %s" % (mask.shape,))
    return (1.0 - ext) * -10000.0


def set_decoder_absa_forward(params, encoder_hidden_states, encoder_attention_mask, cfg):
    bsz, Sk, H = encoder_hidden_states.shape
    nt = cfg['num_generated_triples']
    eps = cfg['layer_norm_eps']
    nh = cfg['num_attention_heads']

    # encoder states streamed as bf16 (matmul-operand dtype; halves HBM traffic)
    enc_bf16 = encoder_hidden_states.astype(jnp.bfloat16)

    # query embeddings -> LayerNorm (dropout = identity in eval mode)
    hs0 = _layernorm_host(params['query_embed'], params['ln0_g'], params['ln0_b'], eps)
    hs = jnp.broadcast_to(hs0[None], (bsz, nt, H)).astype(jnp.bfloat16)

    cross_mask = build_additive_cross_mask(encoder_attention_mask)

    bt = _choose_bt(bsz, nt, Sk, H)
    for lp in params['layers']:
        hs = run_decoder_layer(hs, enc_bf16, cross_mask, lp, nh, eps, bt)
    # TODO(synk): cross-call prefetch of the next layer's weights (P10) to hide the
    #             per-layer weight DMA at small batch sizes.

    tile_sk = _choose_tile_sk(Sk, nt, 8 * H)
    logits4, class_logits = run_metric_and_class(hs, enc_bf16, params, tile_sk)

    hidden_states = hs.astype(jnp.float32)
    aspect_start_logits = logits4[:, 0]
    aspect_end_logits = logits4[:, 1]
    opinion_start_logits = logits4[:, 2]
    opinion_end_logits = logits4[:, 3]
    return (hidden_states, class_logits, aspect_start_logits, aspect_end_logits,
            opinion_start_logits, opinion_end_logits)


# ---------------------------------------------------------------------------
# Deterministic parameter initialization (shapes from __init__)
# ---------------------------------------------------------------------------
def init_params(key, cfg):
    H = cfg['hidden_size']
    I = cfg['intermediate_size']
    nt = cfg['num_generated_triples']
    C = cfg['num_classes']
    keys = iter(jax.random.split(key, 512))
    orth = jax.nn.initializers.orthogonal()
    wdt = jnp.bfloat16                     # matmul-operand weights stored in bf16
    W = max(3 * H, I)

    def lin_w(d_in, d_out, scale=0.02):
        return (jax.random.normal(next(keys), (d_in, d_out), jnp.float32) * scale
                ).astype(wdt)

    def pack_rows(rows):
        """Pack 1-D fp32 vectors into one [n_rows, W] fp32 array (zero padded)."""
        out = jnp.zeros((len(rows), W), jnp.float32)
        for r, v in enumerate(rows):
            out = out.at[r, :v.shape[0]].set(v)
        return out

    def zeros(n):
        return jnp.zeros((n,), jnp.float32)

    def ones(n):
        return jnp.ones((n,), jnp.float32)

    layers = []
    for _ in range(cfg['num_layers']):
        layers.append(dict(
            s_wqkv=jnp.concatenate([lin_w(H, H), lin_w(H, H), lin_w(H, H)], axis=1),
            s_wo=lin_w(H, H),
            c_wq=lin_w(H, H),
            c_wkv=jnp.concatenate([lin_w(H, H), lin_w(H, H)], axis=1),
            c_wo=lin_w(H, H),
            f_w1=lin_w(H, I),
            f_w2=lin_w(I, H),
            # packed small operands (one DMA instead of 13): rows =
            # s_bqkv, s_bo, s_ln_g, s_ln_b, c_bq, c_bkv, c_bo, c_ln_g, c_ln_b,
            # f_b1, f_b2, f_ln_g, f_ln_b
            vec=pack_rows([zeros(3 * H), zeros(H), ones(H), zeros(H),
                           zeros(H), zeros(2 * H), zeros(H), ones(H), zeros(H),
                           zeros(I), zeros(H), ones(H), zeros(H)])))

    params = dict(
        layers=layers,
        ln0_g=jnp.ones((H,), jnp.float32),
        ln0_b=jnp.zeros((H,), jnp.float32),
        query_embed=orth(next(keys), (nt, H), jnp.float32),
        cls_w=lin_w(H, C),
        cls_b=jnp.zeros((1, C), jnp.float32),
        m1_w=orth(next(keys), (H, 8 * H), jnp.float32).astype(wdt),   # [in, out]
        m1_b=jnp.zeros((1, 8 * H), jnp.float32),
        m2_w=orth(next(keys), (H, 8 * H), jnp.float32).astype(wdt),
        m2_b=jnp.zeros((1, 8 * H), jnp.float32),
        m3_w=orth(next(keys), (8, 8 * H), jnp.float32).astype(wdt),   # PyTorch layout
    )
    return params


# ---------------------------------------------------------------------------
if __name__ == "__main__":
    cfg = dict(hidden_size=32, num_attention_heads=4, intermediate_size=64,
               layer_norm_eps=1e-12, hidden_dropout_prob=0.0,
               num_layers=2, num_generated_triples=8, num_classes=5)

    key = jax.random.PRNGKey(0)
    kp, ke = jax.random.split(key)
    params = init_params(kp, cfg)

    bsz, enc_len = 2, 16
    encoder_hidden_states = jax.random.normal(
        ke, (bsz, enc_len, cfg['hidden_size']), jnp.float32)
    encoder_attention_mask = jnp.ones((bsz, enc_len), jnp.float32)  # 2-D mask path

    outs = set_decoder_absa_forward(params, encoder_hidden_states,
                                    encoder_attention_mask, cfg)
    outs = jax.block_until_ready(outs)

    hs, cls_logits, a_s, a_e, o_s, o_e = outs
    assert hs.shape == (bsz, cfg['num_generated_triples'], cfg['hidden_size'])
    assert cls_logits.shape == (bsz, cfg['num_generated_triples'], cfg['num_classes'])
    assert bool(jnp.all(jnp.isfinite(hs))) and bool(jnp.all(jnp.isfinite(cls_logits)))
    for t in (a_s, a_e, o_s, o_e):
        assert t.shape == (bsz, cfg['num_generated_triples'], enc_len)
        assert bool(jnp.all(jnp.isfinite(t)))
    print("KERNEL_OK")
</pallas_src>

<mosaic_0001>
module attributes {stable_mosaic.version = 11 : i64} {
  func.func @_decoder_layer_kernel(%arg0: i32, %arg1: memref<2x8x32xbf16, #tpu.memory_space<vmem>>, %arg2: memref<2x16x32xbf16, #tpu.memory_space<vmem>>, %arg3: memref<2x1x16xf32, #tpu.memory_space<vmem>>, %arg4: memref<32x96xbf16, #tpu.memory_space<vmem>>, %arg5: memref<32x32xbf16, #tpu.memory_space<vmem>>, %arg6: memref<32x32xbf16, #tpu.memory_space<vmem>>, %arg7: memref<32x64xbf16, #tpu.memory_space<vmem>>, %arg8: memref<32x32xbf16, #tpu.memory_space<vmem>>, %arg9: memref<32x64xbf16, #tpu.memory_space<vmem>>, %arg10: memref<64x32xbf16, #tpu.memory_space<vmem>>, %arg11: memref<13x96xf32, #tpu.memory_space<vmem>>, %arg12: memref<2x8x32xbf16, #tpu.memory_space<vmem>>) attributes {dimension_semantics = [#tpu.dimension_semantics<parallel>], iteration_bounds = array<i64: 1>, scalar_prefetch = 0 : i64, scratch_operands = 0 : i64, tpu.core_type = #tpu.core_type<tc>, window_params = [{transform_indices = @transform_0, window_bounds = array<i64: 2, 8, 32>}, {transform_indices = @transform_1, window_bounds = array<i64: 2, 16, 32>}, {transform_indices = @transform_2, window_bounds = array<i64: 2, 1, 16>}, {pipeline_mode = #tpu.pipeline_mode<synchronous>, transform_indices = @transform_3, window_bounds = array<i64: 32, 96>}, {pipeline_mode = #tpu.pipeline_mode<synchronous>, transform_indices = @transform_4, window_bounds = array<i64: 32, 32>}, {pipeline_mode = #tpu.pipeline_mode<synchronous>, transform_indices = @transform_5, window_bounds = array<i64: 32, 32>}, {pipeline_mode = #tpu.pipeline_mode<synchronous>, transform_indices = @transform_6, window_bounds = array<i64: 32, 64>}, {pipeline_mode = #tpu.pipeline_mode<synchronous>, transform_indices = @transform_7, window_bounds = array<i64: 32, 32>}, {pipeline_mode = #tpu.pipeline_mode<synchronous>, transform_indices = @transform_8, window_bounds = array<i64: 32, 64>}, {pipeline_mode = #tpu.pipeline_mode<synchronous>, transform_indices = @transform_9, window_bounds = array<i64: 64, 32>}, {pipeline_mode = #tpu.pipeline_mode<synchronous>, transform_indices = @transform_10, window_bounds = array<i64: 13, 96>}, {transform_indices = @transform_11, window_bounds = array<i64: 2, 8, 32>}]} {
    %c0 = arith.constant 0 : index
    %c0_0 = arith.constant 0 : index
    %0 = vector.load %arg11[%c0, %c0_0] : memref<13x96xf32, #tpu.memory_space<vmem>>, vector<1x96xf32>
    %c1 = arith.constant 1 : index
    %c0_1 = arith.constant 0 : index
    %1 = vector.load %arg11[%c1, %c0_1] : memref<13x96xf32, #tpu.memory_space<vmem>>, vector<1x32xf32>
    %c2 = arith.constant 2 : index
    %c0_2 = arith.constant 0 : index
    %2 = vector.load %arg11[%c2, %c0_2] : memref<13x96xf32, #tpu.memory_space<vmem>>, vector<1x32xf32>
    %c3 = arith.constant 3 : index
    %c0_3 = arith.constant 0 : index
    %3 = vector.load %arg11[%c3, %c0_3] : memref<13x96xf32, #tpu.memory_space<vmem>>, vector<1x32xf32>
    %c4 = arith.constant 4 : index
    %c0_4 = arith.constant 0 : index
    %4 = vector.load %arg11[%c4, %c0_4] : memref<13x96xf32, #tpu.memory_space<vmem>>, vector<1x32xf32>
    %c5 = arith.constant 5 : index
    %c0_5 = arith.constant 0 : index
    %5 = vector.load %arg11[%c5, %c0_5] : memref<13x96xf32, #tpu.memory_space<vmem>>, vector<1x64xf32>
    %c6 = arith.constant 6 : index
    %c0_6 = arith.constant 0 : index
    %6 = vector.load %arg11[%c6, %c0_6] : memref<13x96xf32, #tpu.memory_space<vmem>>, vector<1x32xf32>
    %c7 = arith.constant 7 : index
    %c0_7 = arith.constant 0 : index
    %7 = vector.load %arg11[%c7, %c0_7] : memref<13x96xf32, #tpu.memory_space<vmem>>, vector<1x32xf32>
    %c8 = arith.constant 8 : index
    %c0_8 = arith.constant 0 : index
    %8 = vector.load %arg11[%c8, %c0_8] : memref<13x96xf32, #tpu.memory_space<vmem>>, vector<1x32xf32>
    %c9 = arith.constant 9 : index
    %c0_9 = arith.constant 0 : index
    %9 = vector.load %arg11[%c9, %c0_9] : memref<13x96xf32, #tpu.memory_space<vmem>>, vector<1x64xf32>
    %c10 = arith.constant 10 : index
    %c0_10 = arith.constant 0 : index
    %10 = vector.load %arg11[%c10, %c0_10] : memref<13x96xf32, #tpu.memory_space<vmem>>, vector<1x32xf32>
    %c11 = arith.constant 11 : index
    %c0_11 = arith.constant 0 : index
    %11 = vector.load %arg11[%c11, %c0_11] : memref<13x96xf32, #tpu.memory_space<vmem>>, vector<1x32xf32>
    %c12 = arith.constant 12 : index
    %c0_12 = arith.constant 0 : index
    %12 = vector.load %arg11[%c12, %c0_12] : memref<13x96xf32, #tpu.memory_space<vmem>>, vector<1x32xf32>
    %c0_13 = arith.constant 0 : index
    %c0_14 = arith.constant 0 : index
    %c0_15 = arith.constant 0 : index
    %13 = vector.load %arg1[%c0_13, %c0_14, %c0_15] : memref<2x8x32xbf16, #tpu.memory_space<vmem>>, vector<2x8x32xbf16>
    %14 = arith.extf %13 : vector<2x8x32xbf16> to vector<2x8x32xf32>
    %15 = vector.shape_cast %14 : vector<2x8x32xf32> to vector<16x32xf32>
    %16 = arith.truncf %15 : vector<16x32xf32> to vector<16x32xbf16>
    %c0_16 = arith.constant 0 : index
    %c0_17 = arith.constant 0 : index
    %17 = vector.load %arg4[%c0_16, %c0_17] : memref<32x96xbf16, #tpu.memory_space<vmem>>, vector<32x96xbf16>
    %cst = arith.constant dense<0.000000e+00> : vector<16x96xf32>
    %18 = tpu.matmul %16, %17, %cst {dimension_numbers = #tpu.dot_dimension_numbers<[1], [0], [0], [1], [0, 0, 1, 1], [], []>} : vector<16x32xbf16>, vector<32x96xbf16>, vector<16x96xf32> -> vector<16x96xf32>
    %19 = vector.broadcast %0 : vector<1x96xf32> to vector<16x96xf32>
    %20 = arith.addf %18, %19 : vector<16x96xf32>
    %21 = vector.extract_strided_slice %20 {offsets = [0, 0], sizes = [8, 96], strides = [1, 1]} : vector<16x96xf32> to vector<8x96xf32>
    %22 = vector.extract_strided_slice %21 {offsets = [0, 0], sizes = [8, 32], strides = [1, 1]} : vector<8x96xf32> to vector<8x32xf32>
    %23 = vector.extract_strided_slice %21 {offsets = [0, 32], sizes = [8, 64], strides = [1, 1]} : vector<8x96xf32> to vector<8x64xf32>
    %cst_18 = arith.constant 0.353553385 : f32
    %24 = vector.broadcast %cst_18 : f32 to vector<8x32xf32>
    %25 = arith.mulf %22, %24 : vector<8x32xf32>
    %26 = arith.truncf %25 : vector<8x32xf32> to vector<8x32xbf16>
    %27 = arith.truncf %23 : vector<8x64xf32> to vector<8x64xbf16>
    %28 = vector.extract_strided_slice %27 {offsets = [0, 0], sizes = [8, 8], strides = [1, 1]} : vector<8x64xbf16> to vector<8x8xbf16>
    %29 = vector.extract_strided_slice %27 {offsets = [0, 32], sizes = [8, 8], strides = [1, 1]} : vector<8x64xbf16> to vector<8x8xbf16>
    %30 = vector.extract_strided_slice %26 {offsets = [0, 0], sizes = [8, 8], strides = [1, 1]} : vector<8x32xbf16> to vector<8x8xbf16>
    %cst_19 = arith.constant dense<0.000000e+00> : vector<8x8xf32>
    %31 = tpu.matmul %30, %28, %cst_19 {dimension_numbers = #tpu.dot_dimension_numbers<[1], [1], [0], [0], [0, 0, 1, 0], [], []>} : vector<8x8xbf16>, vector<8x8xbf16>, vector<8x8xf32> -> vector<8x8xf32>
    %cst_20 = arith.constant dense<0xFF800000> : vector<8xf32>
    %32 = vector.multi_reduction <maximumf>, %31, %cst_20 [1] : vector<8x8xf32> to vector<8xf32>
    %33 = vector.shape_cast %32 : vector<8xf32> to vector<8x1xf32>
    %34 = vector.broadcast %33 : vector<8x1xf32> to vector<8x8xf32>
    %35 = arith.subf %31, %34 : vector<8x8xf32>
    %36 = math.exp %35 : vector<8x8xf32>
    %cst_21 = arith.constant dense<0.000000e+00> : vector<8xf32>
    %37 = vector.multi_reduction <add>, %36, %cst_21 [1] : vector<8x8xf32> to vector<8xf32>
    %38 = vector.shape_cast %37 : vector<8xf32> to vector<8x1xf32>
    %39 = tpu.reciprocal %38 {approx = true} : vector<8x1xf32> -> vector<8x1xf32>
    %40 = vector.broadcast %39 : vector<8x1xf32> to vector<8x8xf32>
    %41 = arith.mulf %36, %40 : vector<8x8xf32>
    %42 = arith.truncf %41 : vector<8x8xf32> to vector<8x8xbf16>
    %cst_22 = arith.constant dense<0.000000e+00> : vector<8x8xf32>
    %43 = tpu.matmul %42, %29, %cst_22 {dimension_numbers = #tpu.dot_dimension_numbers<[1], [0], [0], [1], [0, 0, 1, 1], [], []>} : vector<8x8xbf16>, vector<8x8xbf16>, vector<8x8xf32> -> vector<8x8xf32>
    %44 = vector.extract_strided_slice %27 {offsets = [0, 8], sizes = [8, 8], strides = [1, 1]} : vector<8x64xbf16> to vector<8x8xbf16>
    %45 = vector.extract_strided_slice %27 {offsets = [0, 40], sizes = [8, 8], strides = [1, 1]} : vector<8x64xbf16> to vector<8x8xbf16>
    %46 = vector.extract_strided_slice %26 {offsets = [0, 8], sizes = [8, 8], strides = [1, 1]} : vector<8x32xbf16> to vector<8x8xbf16>
    %cst_23 = arith.constant dense<0.000000e+00> : vector<8x8xf32>
    %47 = tpu.matmul %46, %44, %cst_23 {dimension_numbers = #tpu.dot_dimension_numbers<[1], [1], [0], [0], [0, 0, 1, 0], [], []>} : vector<8x8xbf16>, vector<8x8xbf16>, vector<8x8xf32> -> vector<8x8xf32>
    %cst_24 = arith.constant dense<0xFF800000> : vector<8xf32>
    %48 = vector.multi_reduction <maximumf>, %47, %cst_24 [1] : vector<8x8xf32> to vector<8xf32>
    %49 = vector.shape_cast %48 : vector<8xf32> to vector<8x1xf32>
    %50 = vector.broadcast %49 : vector<8x1xf32> to vector<8x8xf32>
    %51 = arith.subf %47, %50 : vector<8x8xf32>
    %52 = math.exp %51 : vector<8x8xf32>
    %cst_25 = arith.constant dense<0.000000e+00> : vector<8xf32>
    %53 = vector.multi_reduction <add>, %52, %cst_25 [1] : vector<8x8xf32> to vector<8xf32>
    %54 = vector.shape_cast %53 : vector<8xf32> to vector<8x1xf32>
    %55 = tpu.reciprocal %54 {approx = true} : vector<8x1xf32> -> vector<8x1xf32>
    %56 = vector.broadcast %55 : vector<8x1xf32> to vector<8x8xf32>
    %57 = arith.mulf %52, %56 : vector<8x8xf32>
    %58 = arith.truncf %57 : vector<8x8xf32> to vector<8x8xbf16>
    %cst_26 = arith.constant dense<0.000000e+00> : vector<8x8xf32>
    %59 = tpu.matmul %58, %45, %cst_26 {dimension_numbers = #tpu.dot_dimension_numbers<[1], [0], [0], [1], [0, 0, 1, 1], [], []>} : vector<8x8xbf16>, vector<8x8xbf16>, vector<8x8xf32> -> vector<8x8xf32>
    %60 = vector.extract_strided_slice %27 {offsets = [0, 16], sizes = [8, 8], strides = [1, 1]} : vector<8x64xbf16> to vector<8x8xbf16>
    %61 = vector.extract_strided_slice %27 {offsets = [0, 48], sizes = [8, 8], strides = [1, 1]} : vector<8x64xbf16> to vector<8x8xbf16>
    %62 = vector.extract_strided_slice %26 {offsets = [0, 16], sizes = [8, 8], strides = [1, 1]} : vector<8x32xbf16> to vector<8x8xbf16>
    %cst_27 = arith.constant dense<0.000000e+00> : vector<8x8xf32>
    %63 = tpu.matmul %62, %60, %cst_27 {dimension_numbers = #tpu.dot_dimension_numbers<[1], [1], [0], [0], [0, 0, 1, 0], [], []>} : vector<8x8xbf16>, vector<8x8xbf16>, vector<8x8xf32> -> vector<8x8xf32>
    %cst_28 = arith.constant dense<0xFF800000> : vector<8xf32>
    %64 = vector.multi_reduction <maximumf>, %63, %cst_28 [1] : vector<8x8xf32> to vector<8xf32>
    %65 = vector.shape_cast %64 : vector<8xf32> to vector<8x1xf32>
    %66 = vector.broadcast %65 : vector<8x1xf32> to vector<8x8xf32>
    %67 = arith.subf %63, %66 : vector<8x8xf32>
    %68 = math.exp %67 : vector<8x8xf32>
    %cst_29 = arith.constant dense<0.000000e+00> : vector<8xf32>
    %69 = vector.multi_reduction <add>, %68, %cst_29 [1] : vector<8x8xf32> to vector<8xf32>
    %70 = vector.shape_cast %69 : vector<8xf32> to vector<8x1xf32>
    %71 = tpu.reciprocal %70 {approx = true} : vector<8x1xf32> -> vector<8x1xf32>
    %72 = vector.broadcast %71 : vector<8x1xf32> to vector<8x8xf32>
    %73 = arith.mulf %68, %72 : vector<8x8xf32>
    %74 = arith.truncf %73 : vector<8x8xf32> to vector<8x8xbf16>
    %cst_30 = arith.constant dense<0.000000e+00> : vector<8x8xf32>
    %75 = tpu.matmul %74, %61, %cst_30 {dimension_numbers = #tpu.dot_dimension_numbers<[1], [0], [0], [1], [0, 0, 1, 1], [], []>} : vector<8x8xbf16>, vector<8x8xbf16>, vector<8x8xf32> -> vector<8x8xf32>
    %76 = vector.extract_strided_slice %27 {offsets = [0, 24], sizes = [8, 8], strides = [1, 1]} : vector<8x64xbf16> to vector<8x8xbf16>
    %77 = vector.extract_strided_slice %27 {offsets = [0, 56], sizes = [8, 8], strides = [1, 1]} : vector<8x64xbf16> to vector<8x8xbf16>
    %78 = vector.extract_strided_slice %26 {offsets = [0, 24], sizes = [8, 8], strides = [1, 1]} : vector<8x32xbf16> to vector<8x8xbf16>
    %cst_31 = arith.constant dense<0.000000e+00> : vector<8x8xf32>
    %79 = tpu.matmul %78, %76, %cst_31 {dimension_numbers = #tpu.dot_dimension_numbers<[1], [1], [0], [0], [0, 0, 1, 0], [], []>} : vector<8x8xbf16>, vector<8x8xbf16>, vector<8x8xf32> -> vector<8x8xf32>
    %cst_32 = arith.constant dense<0xFF800000> : vector<8xf32>
    %80 = vector.multi_reduction <maximumf>, %79, %cst_32 [1] : vector<8x8xf32> to vector<8xf32>
    %81 = vector.shape_cast %80 : vector<8xf32> to vector<8x1xf32>
    %82 = vector.broadcast %81 : vector<8x1xf32> to vector<8x8xf32>
    %83 = arith.subf %79, %82 : vector<8x8xf32>
    %84 = math.exp %83 : vector<8x8xf32>
    %cst_33 = arith.constant dense<0.000000e+00> : vector<8xf32>
    %85 = vector.multi_reduction <add>, %84, %cst_33 [1] : vector<8x8xf32> to vector<8xf32>
    %86 = vector.shape_cast %85 : vector<8xf32> to vector<8x1xf32>
    %87 = tpu.reciprocal %86 {approx = true} : vector<8x1xf32> -> vector<8x1xf32>
    %88 = vector.broadcast %87 : vector<8x1xf32> to vector<8x8xf32>
    %89 = arith.mulf %84, %88 : vector<8x8xf32>
    %90 = arith.truncf %89 : vector<8x8xf32> to vector<8x8xbf16>
    %cst_34 = arith.constant dense<0.000000e+00> : vector<8x8xf32>
    %91 = tpu.matmul %90, %77, %cst_34 {dimension_numbers = #tpu.dot_dimension_numbers<[1], [0], [0], [1], [0, 0, 1, 1], [], []>} : vector<8x8xbf16>, vector<8x8xbf16>, vector<8x8xf32> -> vector<8x8xf32>
    %92 = tpu.concatenate %43, %59, %75, %91 in 1 : vector<8x8xf32>, vector<8x8xf32>, vector<8x8xf32>, vector<8x8xf32> -> vector<8x32xf32>
    %93 = vector.extract_strided_slice %20 {offsets = [8, 0], sizes = [8, 96], strides = [1, 1]} : vector<16x96xf32> to vector<8x96xf32>
    %94 = vector.extract_strided_slice %93 {offsets = [0, 0], sizes = [8, 32], strides = [1, 1]} : vector<8x96xf32> to vector<8x32xf32>
    %95 = vector.extract_strided_slice %93 {offsets = [0, 32], sizes = [8, 64], strides = [1, 1]} : vector<8x96xf32> to vector<8x64xf32>
    %cst_35 = arith.constant 0.353553385 : f32
    %96 = vector.broadcast %cst_35 : f32 to vector<8x32xf32>
    %97 = arith.mulf %94, %96 : vector<8x32xf32>
    %98 = arith.truncf %97 : vector<8x32xf32> to vector<8x32xbf16>
    %99 = arith.truncf %95 : vector<8x64xf32> to vector<8x64xbf16>
    %100 = vector.extract_strided_slice %99 {offsets = [0, 0], sizes = [8, 8], strides = [1, 1]} : vector<8x64xbf16> to vector<8x8xbf16>
    %101 = vector.extract_strided_slice %99 {offsets = [0, 32], sizes = [8, 8], strides = [1, 1]} : vector<8x64xbf16> to vector<8x8xbf16>
    %102 = vector.extract_strided_slice %98 {offsets = [0, 0], sizes = [8, 8], strides = [1, 1]} : vector<8x32xbf16> to vector<8x8xbf16>
    %cst_36 = arith.constant dense<0.000000e+00> : vector<8x8xf32>
    %103 = tpu.matmul %102, %100, %cst_36 {dimension_numbers = #tpu.dot_dimension_numbers<[1], [1], [0], [0], [0, 0, 1, 0], [], []>} : vector<8x8xbf16>, vector<8x8xbf16>, vector<8x8xf32> -> vector<8x8xf32>
    %cst_37 = arith.constant dense<0xFF800000> : vector<8xf32>
    %104 = vector.multi_reduction <maximumf>, %103, %cst_37 [1] : vector<8x8xf32> to vector<8xf32>
    %105 = vector.shape_cast %104 : vector<8xf32> to vector<8x1xf32>
    %106 = vector.broadcast %105 : vector<8x1xf32> to vector<8x8xf32>
    %107 = arith.subf %103, %106 : vector<8x8xf32>
    %108 = math.exp %107 : vector<8x8xf32>
    %cst_38 = arith.constant dense<0.000000e+00> : vector<8xf32>
    %109 = vector.multi_reduction <add>, %108, %cst_38 [1] : vector<8x8xf32> to vector<8xf32>
    %110 = vector.shape_cast %109 : vector<8xf32> to vector<8x1xf32>
    %111 = tpu.reciprocal %110 {approx = true} : vector<8x1xf32> -> vector<8x1xf32>
    %112 = vector.broadcast %111 : vector<8x1xf32> to vector<8x8xf32>
    %113 = arith.mulf %108, %112 : vector<8x8xf32>
    %114 = arith.truncf %113 : vector<8x8xf32> to vector<8x8xbf16>
    %cst_39 = arith.constant dense<0.000000e+00> : vector<8x8xf32>
    %115 = tpu.matmul %114, %101, %cst_39 {dimension_numbers = #tpu.dot_dimension_numbers<[1], [0], [0], [1], [0, 0, 1, 1], [], []>} : vector<8x8xbf16>, vector<8x8xbf16>, vector<8x8xf32> -> vector<8x8xf32>
    %116 = vector.extract_strided_slice %99 {offsets = [0, 8], sizes = [8, 8], strides = [1, 1]} : vector<8x64xbf16> to vector<8x8xbf16>
    %117 = vector.extract_strided_slice %99 {offsets = [0, 40], sizes = [8, 8], strides = [1, 1]} : vector<8x64xbf16> to vector<8x8xbf16>
    %118 = vector.extract_strided_slice %98 {offsets = [0, 8], sizes = [8, 8], strides = [1, 1]} : vector<8x32xbf16> to vector<8x8xbf16>
    %cst_40 = arith.constant dense<0.000000e+00> : vector<8x8xf32>
    %119 = tpu.matmul %118, %116, %cst_40 {dimension_numbers = #tpu.dot_dimension_numbers<[1], [1], [0], [0], [0, 0, 1, 0], [], []>} : vector<8x8xbf16>, vector<8x8xbf16>, vector<8x8xf32> -> vector<8x8xf32>
    %cst_41 = arith.constant dense<0xFF800000> : vector<8xf32>
    %120 = vector.multi_reduction <maximumf>, %119, %cst_41 [1] : vector<8x8xf32> to vector<8xf32>
    %121 = vector.shape_cast %120 : vector<8xf32> to vector<8x1xf32>
    %122 = vector.broadcast %121 : vector<8x1xf32> to vector<8x8xf32>
    %123 = arith.subf %119, %122 : vector<8x8xf32>
    %124 = math.exp %123 : vector<8x8xf32>
    %cst_42 = arith.constant dense<0.000000e+00> : vector<8xf32>
    %125 = vector.multi_reduction <add>, %124, %cst_42 [1] : vector<8x8xf32> to vector<8xf32>
    %126 = vector.shape_cast %125 : vector<8xf32> to vector<8x1xf32>
    %127 = tpu.reciprocal %126 {approx = true} : vector<8x1xf32> -> vector<8x1xf32>
    %128 = vector.broadcast %127 : vector<8x1xf32> to vector<8x8xf32>
    %129 = arith.mulf %124, %128 : vector<8x8xf32>
    %130 = arith.truncf %129 : vector<8x8xf32> to vector<8x8xbf16>
    %cst_43 = arith.constant dense<0.000000e+00> : vector<8x8xf32>
    %131 = tpu.matmul %130, %117, %cst_43 {dimension_numbers = #tpu.dot_dimension_numbers<[1], [0], [0], [1], [0, 0, 1, 1], [], []>} : vector<8x8xbf16>, vector<8x8xbf16>, vector<8x8xf32> -> vector<8x8xf32>
    %132 = vector.extract_strided_slice %99 {offsets = [0, 16], sizes = [8, 8], strides = [1, 1]} : vector<8x64xbf16> to vector<8x8xbf16>
    %133 = vector.extract_strided_slice %99 {offsets = [0, 48], sizes = [8, 8], strides = [1, 1]} : vector<8x64xbf16> to vector<8x8xbf16>
    %134 = vector.extract_strided_slice %98 {offsets = [0, 16], sizes = [8, 8], strides = [1, 1]} : vector<8x32xbf16> to vector<8x8xbf16>
    %cst_44 = arith.constant dense<0.000000e+00> : vector<8x8xf32>
    %135 = tpu.matmul %134, %132, %cst_44 {dimension_numbers = #tpu.dot_dimension_numbers<[1], [1], [0], [0], [0, 0, 1, 0], [], []>} : vector<8x8xbf16>, vector<8x8xbf16>, vector<8x8xf32> -> vector<8x8xf32>
    %cst_45 = arith.constant dense<0xFF800000> : vector<8xf32>
    %136 = vector.multi_reduction <maximumf>, %135, %cst_45 [1] : vector<8x8xf32> to vector<8xf32>
    %137 = vector.shape_cast %136 : vector<8xf32> to vector<8x1xf32>
    %138 = vector.broadcast %137 : vector<8x1xf32> to vector<8x8xf32>
    %139 = arith.subf %135, %138 : vector<8x8xf32>
    %140 = math.exp %139 : vector<8x8xf32>
    %cst_46 = arith.constant dense<0.000000e+00> : vector<8xf32>
    %141 = vector.multi_reduction <add>, %140, %cst_46 [1] : vector<8x8xf32> to vector<8xf32>
    %142 = vector.shape_cast %141 : vector<8xf32> to vector<8x1xf32>
    %143 = tpu.reciprocal %142 {approx = true} : vector<8x1xf32> -> vector<8x1xf32>
    %144 = vector.broadcast %143 : vector<8x1xf32> to vector<8x8xf32>
    %145 = arith.mulf %140, %144 : vector<8x8xf32>
    %146 = arith.truncf %145 : vector<8x8xf32> to vector<8x8xbf16>
    %cst_47 = arith.constant dense<0.000000e+00> : vector<8x8xf32>
    %147 = tpu.matmul %146, %133, %cst_47 {dimension_numbers = #tpu.dot_dimension_numbers<[1], [0], [0], [1], [0, 0, 1, 1], [], []>} : vector<8x8xbf16>, vector<8x8xbf16>, vector<8x8xf32> -> vector<8x8xf32>
    %148 = vector.extract_strided_slice %99 {offsets = [0, 24], sizes = [8, 8], strides = [1, 1]} : vector<8x64xbf16> to vector<8x8xbf16>
    %149 = vector.extract_strided_slice %99 {offsets = [0, 56], sizes = [8, 8], strides = [1, 1]} : vector<8x64xbf16> to vector<8x8xbf16>
    %150 = vector.extract_strided_slice %98 {offsets = [0, 24], sizes = [8, 8], strides = [1, 1]} : vector<8x32xbf16> to vector<8x8xbf16>
    %cst_48 = arith.constant dense<0.000000e+00> : vector<8x8xf32>
    %151 = tpu.matmul %150, %148, %cst_48 {dimension_numbers = #tpu.dot_dimension_numbers<[1], [1], [0], [0], [0, 0, 1, 0], [], []>} : vector<8x8xbf16>, vector<8x8xbf16>, vector<8x8xf32> -> vector<8x8xf32>
    %cst_49 = arith.constant dense<0xFF800000> : vector<8xf32>
    %152 = vector.multi_reduction <maximumf>, %151, %cst_49 [1] : vector<8x8xf32> to vector<8xf32>
    %153 = vector.shape_cast %152 : vector<8xf32> to vector<8x1xf32>
    %154 = vector.broadcast %153 : vector<8x1xf32> to vector<8x8xf32>
    %155 = arith.subf %151, %154 : vector<8x8xf32>
    %156 = math.exp %155 : vector<8x8xf32>
    %cst_50 = arith.constant dense<0.000000e+00> : vector<8xf32>
    %157 = vector.multi_reduction <add>, %156, %cst_50 [1] : vector<8x8xf32> to vector<8xf32>
    %158 = vector.shape_cast %157 : vector<8xf32> to vector<8x1xf32>
    %159 = tpu.reciprocal %158 {approx = true} : vector<8x1xf32> -> vector<8x1xf32>
    %160 = vector.broadcast %159 : vector<8x1xf32> to vector<8x8xf32>
    %161 = arith.mulf %156, %160 : vector<8x8xf32>
    %162 = arith.truncf %161 : vector<8x8xf32> to vector<8x8xbf16>
    %cst_51 = arith.constant dense<0.000000e+00> : vector<8x8xf32>
    %163 = tpu.matmul %162, %149, %cst_51 {dimension_numbers = #tpu.dot_dimension_numbers<[1], [0], [0], [1], [0, 0, 1, 1], [], []>} : vector<8x8xbf16>, vector<8x8xbf16>, vector<8x8xf32> -> vector<8x8xf32>
    %164 = tpu.concatenate %115, %131, %147, %163 in 1 : vector<8x8xf32>, vector<8x8xf32>, vector<8x8xf32>, vector<8x8xf32> -> vector<8x32xf32>
    %165 = tpu.concatenate %92, %164 in 0 : vector<8x32xf32>, vector<8x32xf32> -> vector<16x32xf32>
    %166 = arith.truncf %165 : vector<16x32xf32> to vector<16x32xbf16>
    %c0_52 = arith.constant 0 : index
    %c0_53 = arith.constant 0 : index
    %167 = vector.load %arg5[%c0_52, %c0_53] : memref<32x32xbf16, #tpu.memory_space<vmem>>, vector<32x32xbf16>
    %cst_54 = arith.constant dense<0.000000e+00> : vector<16x32xf32>
    %168 = tpu.matmul %166, %167, %cst_54 {dimension_numbers = #tpu.dot_dimension_numbers<[1], [0], [0], [1], [0, 0, 1, 1], [], []>} : vector<16x32xbf16>, vector<32x32xbf16>, vector<16x32xf32> -> vector<16x32xf32>
    %169 = vector.broadcast %1 : vector<1x32xf32> to vector<16x32xf32>
    %170 = arith.addf %168, %169 : vector<16x32xf32>
    %171 = arith.addf %170, %15 : vector<16x32xf32>
    %cst_55 = arith.constant dense<0.000000e+00> : vector<16xf32>
    %172 = vector.multi_reduction <add>, %171, %cst_55 [1] : vector<16x32xf32> to vector<16xf32>
    %173 = vector.shape_cast %172 : vector<16xf32> to vector<16x1xf32>
    %cst_56 = arith.constant 3.200000e+01 : f32
    %174 = vector.broadcast %cst_56 : f32 to vector<16x1xf32>
    %175 = arith.divf %173, %174 : vector<16x1xf32>
    %176 = vector.broadcast %175 : vector<16x1xf32> to vector<16x32xf32>
    %177 = arith.subf %171, %176 : vector<16x32xf32>
    %178 = arith.mulf %177, %177 : vector<16x32xf32>
    %cst_57 = arith.constant dense<0.000000e+00> : vector<16xf32>
    %179 = vector.multi_reduction <add>, %178, %cst_57 [1] : vector<16x32xf32> to vector<16xf32>
    %180 = vector.shape_cast %179 : vector<16xf32> to vector<16x1xf32>
    %cst_58 = arith.constant 3.200000e+01 : f32
    %181 = vector.broadcast %cst_58 : f32 to vector<16x1xf32>
    %182 = arith.divf %180, %181 : vector<16x1xf32>
    %183 = vector.broadcast %175 : vector<16x1xf32> to vector<16x32xf32>
    %184 = arith.subf %171, %183 : vector<16x32xf32>
    %cst_59 = arith.constant 9.99999996E-13 : f32
    %185 = vector.broadcast %cst_59 : f32 to vector<16x1xf32>
    %186 = arith.addf %182, %185 : vector<16x1xf32>
    %187 = math.rsqrt %186 : vector<16x1xf32>
    %188 = vector.broadcast %187 : vector<16x1xf32> to vector<16x32xf32>
    %189 = arith.mulf %184, %188 : vector<16x32xf32>
    %190 = vector.broadcast %2 : vector<1x32xf32> to vector<16x32xf32>
    %191 = arith.mulf %189, %190 : vector<16x32xf32>
    %192 = vector.broadcast %3 : vector<1x32xf32> to vector<16x32xf32>
    %193 = arith.addf %191, %192 : vector<16x32xf32>
    %194 = arith.truncf %193 : vector<16x32xf32> to vector<16x32xbf16>
    %c0_60 = arith.constant 0 : index
    %c0_61 = arith.constant 0 : index
    %195 = vector.load %arg6[%c0_60, %c0_61] : memref<32x32xbf16, #tpu.memory_space<vmem>>, vector<32x32xbf16>
    %cst_62 = arith.constant dense<0.000000e+00> : vector<16x32xf32>
    %196 = tpu.matmul %194, %195, %cst_62 {dimension_numbers = #tpu.dot_dimension_numbers<[1], [0], [0], [1], [0, 0, 1, 1], [], []>} : vector<16x32xbf16>, vector<32x32xbf16>, vector<16x32xf32> -> vector<16x32xf32>
    %197 = vector.broadcast %4 : vector<1x32xf32> to vector<16x32xf32>
    %198 = arith.addf %196, %197 : vector<16x32xf32>
    %c0_63 = arith.constant 0 : index
    %c0_64 = arith.constant 0 : index
    %c0_65 = arith.constant 0 : index
    %199 = vector.load %arg2[%c0_63, %c0_64, %c0_65] : memref<2x16x32xbf16, #tpu.memory_space<vmem>>, vector<1x16x32xbf16>
    %200 = vector.shape_cast %199 : vector<1x16x32xbf16> to vector<16x32xbf16>
    %c0_66 = arith.constant 0 : index
    %c0_67 = arith.constant 0 : index
    %201 = vector.load %arg7[%c0_66, %c0_67] : memref<32x64xbf16, #tpu.memory_space<vmem>>, vector<32x64xbf16>
    %cst_68 = arith.constant dense<0.000000e+00> : vector<16x64xf32>
    %202 = tpu.matmul %200, %201, %cst_68 {dimension_numbers = #tpu.dot_dimension_numbers<[1], [0], [0], [1], [0, 0, 1, 1], [], []>} : vector<16x32xbf16>, vector<32x64xbf16>, vector<16x64xf32> -> vector<16x64xf32>
    %203 = vector.broadcast %5 : vector<1x64xf32> to vector<16x64xf32>
    %204 = arith.addf %202, %203 : vector<16x64xf32>
    %205 = vector.extract_strided_slice %198 {offsets = [0, 0], sizes = [8, 32], strides = [1, 1]} : vector<16x32xf32> to vector<8x32xf32>
    %c0_69 = arith.constant 0 : index
    %c0_70 = arith.constant 0 : index
    %c0_71 = arith.constant 0 : index
    %206 = vector.load %arg3[%c0_69, %c0_70, %c0_71] : memref<2x1x16xf32, #tpu.memory_space<vmem>>, vector<1x1x16xf32>
    %207 = vector.shape_cast %206 : vector<1x1x16xf32> to vector<1x16xf32>
    %cst_72 = arith.constant 0.353553385 : f32
    %208 = vector.broadcast %cst_72 : f32 to vector<8x32xf32>
    %209 = arith.mulf %205, %208 : vector<8x32xf32>
    %210 = arith.truncf %209 : vector<8x32xf32> to vector<8x32xbf16>
    %211 = arith.truncf %204 : vector<16x64xf32> to vector<16x64xbf16>
    %212 = vector.extract_strided_slice %211 {offsets = [0, 0], sizes = [16, 8], strides = [1, 1]} : vector<16x64xbf16> to vector<16x8xbf16>
    %213 = vector.extract_strided_slice %211 {offsets = [0, 32], sizes = [16, 8], strides = [1, 1]} : vector<16x64xbf16> to vector<16x8xbf16>
    %214 = vector.extract_strided_slice %210 {offsets = [0, 0], sizes = [8, 8], strides = [1, 1]} : vector<8x32xbf16> to vector<8x8xbf16>
    %cst_73 = arith.constant dense<0.000000e+00> : vector<8x16xf32>
    %215 = tpu.matmul %214, %212, %cst_73 {dimension_numbers = #tpu.dot_dimension_numbers<[1], [1], [0], [0], [0, 0, 1, 0], [], []>} : vector<8x8xbf16>, vector<16x8xbf16>, vector<8x16xf32> -> vector<8x16xf32>
    %216 = vector.broadcast %207 : vector<1x16xf32> to vector<8x16xf32>
    %217 = arith.addf %215, %216 : vector<8x16xf32>
    %cst_74 = arith.constant dense<0xFF800000> : vector<8xf32>
    %218 = vector.multi_reduction <maximumf>, %217, %cst_74 [1] : vector<8x16xf32> to vector<8xf32>
    %219 = vector.shape_cast %218 : vector<8xf32> to vector<8x1xf32>
    %220 = vector.broadcast %219 : vector<8x1xf32> to vector<8x16xf32>
    %221 = arith.subf %217, %220 : vector<8x16xf32>
    %222 = math.exp %221 : vector<8x16xf32>
    %cst_75 = arith.constant dense<0.000000e+00> : vector<8xf32>
    %223 = vector.multi_reduction <add>, %222, %cst_75 [1] : vector<8x16xf32> to vector<8xf32>
    %224 = vector.shape_cast %223 : vector<8xf32> to vector<8x1xf32>
    %225 = tpu.reciprocal %224 {approx = true} : vector<8x1xf32> -> vector<8x1xf32>
    %226 = vector.broadcast %225 : vector<8x1xf32> to vector<8x16xf32>
    %227 = arith.mulf %222, %226 : vector<8x16xf32>
    %228 = arith.truncf %227 : vector<8x16xf32> to vector<8x16xbf16>
    %cst_76 = arith.constant dense<0.000000e+00> : vector<8x8xf32>
    %229 = tpu.matmul %228, %213, %cst_76 {dimension_numbers = #tpu.dot_dimension_numbers<[1], [0], [0], [1], [0, 0, 1, 1], [], []>} : vector<8x16xbf16>, vector<16x8xbf16>, vector<8x8xf32> -> vector<8x8xf32>
    %230 = vector.extract_strided_slice %211 {offsets = [0, 8], sizes = [16, 8], strides = [1, 1]} : vector<16x64xbf16> to vector<16x8xbf16>
    %231 = vector.extract_strided_slice %211 {offsets = [0, 40], sizes = [16, 8], strides = [1, 1]} : vector<16x64xbf16> to vector<16x8xbf16>
    %232 = vector.extract_strided_slice %210 {offsets = [0, 8], sizes = [8, 8], strides = [1, 1]} : vector<8x32xbf16> to vector<8x8xbf16>
    %cst_77 = arith.constant dense<0.000000e+00> : vector<8x16xf32>
    %233 = tpu.matmul %232, %230, %cst_77 {dimension_numbers = #tpu.dot_dimension_numbers<[1], [1], [0], [0], [0, 0, 1, 0], [], []>} : vector<8x8xbf16>, vector<16x8xbf16>, vector<8x16xf32> -> vector<8x16xf32>
    %234 = vector.broadcast %207 : vector<1x16xf32> to vector<8x16xf32>
    %235 = arith.addf %233, %234 : vector<8x16xf32>
    %cst_78 = arith.constant dense<0xFF800000> : vector<8xf32>
    %236 = vector.multi_reduction <maximumf>, %235, %cst_78 [1] : vector<8x16xf32> to vector<8xf32>
    %237 = vector.shape_cast %236 : vector<8xf32> to vector<8x1xf32>
    %238 = vector.broadcast %237 : vector<8x1xf32> to vector<8x16xf32>
    %239 = arith.subf %235, %238 : vector<8x16xf32>
    %240 = math.exp %239 : vector<8x16xf32>
    %cst_79 = arith.constant dense<0.000000e+00> : vector<8xf32>
    %241 = vector.multi_reduction <add>, %240, %cst_79 [1] : vector<8x16xf32> to vector<8xf32>
    %242 = vector.shape_cast %241 : vector<8xf32> to vector<8x1xf32>
    %243 = tpu.reciprocal %242 {approx = true} : vector<8x1xf32> -> vector<8x1xf32>
    %244 = vector.broadcast %243 : vector<8x1xf32> to vector<8x16xf32>
    %245 = arith.mulf %240, %244 : vector<8x16xf32>
    %246 = arith.truncf %245 : vector<8x16xf32> to vector<8x16xbf16>
    %cst_80 = arith.constant dense<0.000000e+00> : vector<8x8xf32>
    %247 = tpu.matmul %246, %231, %cst_80 {dimension_numbers = #tpu.dot_dimension_numbers<[1], [0], [0], [1], [0, 0, 1, 1], [], []>} : vector<8x16xbf16>, vector<16x8xbf16>, vector<8x8xf32> -> vector<8x8xf32>
    %248 = vector.extract_strided_slice %211 {offsets = [0, 16], sizes = [16, 8], strides = [1, 1]} : vector<16x64xbf16> to vector<16x8xbf16>
    %249 = vector.extract_strided_slice %211 {offsets = [0, 48], sizes = [16, 8], strides = [1, 1]} : vector<16x64xbf16> to vector<16x8xbf16>
    %250 = vector.extract_strided_slice %210 {offsets = [0, 16], sizes = [8, 8], strides = [1, 1]} : vector<8x32xbf16> to vector<8x8xbf16>
    %cst_81 = arith.constant dense<0.000000e+00> : vector<8x16xf32>
    %251 = tpu.matmul %250, %248, %cst_81 {dimension_numbers = #tpu.dot_dimension_numbers<[1], [1], [0], [0], [0, 0, 1, 0], [], []>} : vector<8x8xbf16>, vector<16x8xbf16>, vector<8x16xf32> -> vector<8x16xf32>
    %252 = vector.broadcast %207 : vector<1x16xf32> to vector<8x16xf32>
    %253 = arith.addf %251, %252 : vector<8x16xf32>
    %cst_82 = arith.constant dense<0xFF800000> : vector<8xf32>
    %254 = vector.multi_reduction <maximumf>, %253, %cst_82 [1] : vector<8x16xf32> to vector<8xf32>
    %255 = vector.shape_cast %254 : vector<8xf32> to vector<8x1xf32>
    %256 = vector.broadcast %255 : vector<8x1xf32> to vector<8x16xf32>
    %257 = arith.subf %253, %256 : vector<8x16xf32>
    %258 = math.exp %257 : vector<8x16xf32>
    %cst_83 = arith.constant dense<0.000000e+00> : vector<8xf32>
    %259 = vector.multi_reduction <add>, %258, %cst_83 [1] : vector<8x16xf32> to vector<8xf32>
    %260 = vector.shape_cast %259 : vector<8xf32> to vector<8x1xf32>
    %261 = tpu.reciprocal %260 {approx = true} : vector<8x1xf32> -> vector<8x1xf32>
    %262 = vector.broadcast %261 : vector<8x1xf32> to vector<8x16xf32>
    %263 = arith.mulf %258, %262 : vector<8x16xf32>
    %264 = arith.truncf %263 : vector<8x16xf32> to vector<8x16xbf16>
    %cst_84 = arith.constant dense<0.000000e+00> : vector<8x8xf32>
    %265 = tpu.matmul %264, %249, %cst_84 {dimension_numbers = #tpu.dot_dimension_numbers<[1], [0], [0], [1], [0, 0, 1, 1], [], []>} : vector<8x16xbf16>, vector<16x8xbf16>, vector<8x8xf32> -> vector<8x8xf32>
    %266 = vector.extract_strided_slice %211 {offsets = [0, 24], sizes = [16, 8], strides = [1, 1]} : vector<16x64xbf16> to vector<16x8xbf16>
    %267 = vector.extract_strided_slice %211 {offsets = [0, 56], sizes = [16, 8], strides = [1, 1]} : vector<16x64xbf16> to vector<16x8xbf16>
    %268 = vector.extract_strided_slice %210 {offsets = [0, 24], sizes = [8, 8], strides = [1, 1]} : vector<8x32xbf16> to vector<8x8xbf16>
    %cst_85 = arith.constant dense<0.000000e+00> : vector<8x16xf32>
    %269 = tpu.matmul %268, %266, %cst_85 {dimension_numbers = #tpu.dot_dimension_numbers<[1], [1], [0], [0], [0, 0, 1, 0], [], []>} : vector<8x8xbf16>, vector<16x8xbf16>, vector<8x16xf32> -> vector<8x16xf32>
    %270 = vector.broadcast %207 : vector<1x16xf32> to vector<8x16xf32>
    %271 = arith.addf %269, %270 : vector<8x16xf32>
    %cst_86 = arith.constant dense<0xFF800000> : vector<8xf32>
    %272 = vector.multi_reduction <maximumf>, %271, %cst_86 [1] : vector<8x16xf32> to vector<8xf32>
    %273 = vector.shape_cast %272 : vector<8xf32> to vector<8x1xf32>
    %274 = vector.broadcast %273 : vector<8x1xf32> to vector<8x16xf32>
    %275 = arith.subf %271, %274 : vector<8x16xf32>
    %276 = math.exp %275 : vector<8x16xf32>
    %cst_87 = arith.constant dense<0.000000e+00> : vector<8xf32>
    %277 = vector.multi_reduction <add>, %276, %cst_87 [1] : vector<8x16xf32> to vector<8xf32>
    %278 = vector.shape_cast %277 : vector<8xf32> to vector<8x1xf32>
    %279 = tpu.reciprocal %278 {approx = true} : vector<8x1xf32> -> vector<8x1xf32>
    %280 = vector.broadcast %279 : vector<8x1xf32> to vector<8x16xf32>
    %281 = arith.mulf %276, %280 : vector<8x16xf32>
    %282 = arith.truncf %281 : vector<8x16xf32> to vector<8x16xbf16>
    %cst_88 = arith.constant dense<0.000000e+00> : vector<8x8xf32>
    %283 = tpu.matmul %282, %267, %cst_88 {dimension_numbers = #tpu.dot_dimension_numbers<[1], [0], [0], [1], [0, 0, 1, 1], [], []>} : vector<8x16xbf16>, vector<16x8xbf16>, vector<8x8xf32> -> vector<8x8xf32>
    %284 = tpu.concatenate %229, %247, %265, %283 in 1 : vector<8x8xf32>, vector<8x8xf32>, vector<8x8xf32>, vector<8x8xf32> -> vector<8x32xf32>
    %c1_89 = arith.constant 1 : index
    %c0_90 = arith.constant 0 : index
    %c0_91 = arith.constant 0 : index
    %285 = vector.load %arg2[%c1_89, %c0_90, %c0_91] : memref<2x16x32xbf16, #tpu.memory_space<vmem>>, vector<1x16x32xbf16>
    %286 = vector.shape_cast %285 : vector<1x16x32xbf16> to vector<16x32xbf16>
    %c0_92 = arith.constant 0 : index
    %c0_93 = arith.constant 0 : index
    %287 = vector.load %arg7[%c0_92, %c0_93] : memref<32x64xbf16, #tpu.memory_space<vmem>>, vector<32x64xbf16>
    %cst_94 = arith.constant dense<0.000000e+00> : vector<16x64xf32>
    %288 = tpu.matmul %286, %287, %cst_94 {dimension_numbers = #tpu.dot_dimension_numbers<[1], [0], [0], [1], [0, 0, 1, 1], [], []>} : vector<16x32xbf16>, vector<32x64xbf16>, vector<16x64xf32> -> vector<16x64xf32>
    %289 = vector.broadcast %5 : vector<1x64xf32> to vector<16x64xf32>
    %290 = arith.addf %288, %289 : vector<16x64xf32>
    %291 = vector.extract_strided_slice %198 {offsets = [8, 0], sizes = [8, 32], strides = [1, 1]} : vector<16x32xf32> to vector<8x32xf32>
    %c1_95 = arith.constant 1 : index
    %c0_96 = arith.constant 0 : index
    %c0_97 = arith.constant 0 : index
    %292 = vector.load %arg3[%c1_95, %c0_96, %c0_97] : memref<2x1x16xf32, #tpu.memory_space<vmem>>, vector<1x1x16xf32>
    %293 = vector.shape_cast %292 : vector<1x1x16xf32> to vector<1x16xf32>
    %cst_98 = arith.constant 0.353553385 : f32
    %294 = vector.broadcast %cst_98 : f32 to vector<8x32xf32>
    %295 = arith.mulf %291, %294 : vector<8x32xf32>
    %296 = arith.truncf %295 : vector<8x32xf32> to vector<8x32xbf16>
    %297 = arith.truncf %290 : vector<16x64xf32> to vector<16x64xbf16>
    %298 = vector.extract_strided_slice %297 {offsets = [0, 0], sizes = [16, 8], strides = [1, 1]} : vector<16x64xbf16> to vector<16x8xbf16>
    %299 = vector.extract_strided_slice %297 {offsets = [0, 32], sizes = [16, 8], strides = [1, 1]} : vector<16x64xbf16> to vector<16x8xbf16>
    %300 = vector.extract_strided_slice %296 {offsets = [0, 0], sizes = [8, 8], strides = [1, 1]} : vector<8x32xbf16> to vector<8x8xbf16>
    %cst_99 = arith.constant dense<0.000000e+00> : vector<8x16xf32>
    %301 = tpu.matmul %300, %298, %cst_99 {dimension_numbers = #tpu.dot_dimension_numbers<[1], [1], [0], [0], [0, 0, 1, 0], [], []>} : vector<8x8xbf16>, vector<16x8xbf16>, vector<8x16xf32> -> vector<8x16xf32>
    %302 = vector.broadcast %293 : vector<1x16xf32> to vector<8x16xf32>
    %303 = arith.addf %301, %302 : vector<8x16xf32>
    %cst_100 = arith.constant dense<0xFF800000> : vector<8xf32>
    %304 = vector.multi_reduction <maximumf>, %303, %cst_100 [1] : vector<8x16xf32> to vector<8xf32>
    %305 = vector.shape_cast %304 : vector<8xf32> to vector<8x1xf32>
    %306 = vector.broadcast %305 : vector<8x1xf32> to vector<8x16xf32>
    %307 = arith.subf %303, %306 : vector<8x16xf32>
    %308 = math.exp %307 : vector<8x16xf32>
    %cst_101 = arith.constant dense<0.000000e+00> : vector<8xf32>
    %309 = vector.multi_reduction <add>, %308, %cst_101 [1] : vector<8x16xf32> to vector<8xf32>
    %310 = vector.shape_cast %309 : vector<8xf32> to vector<8x1xf32>
    %311 = tpu.reciprocal %310 {approx = true} : vector<8x1xf32> -> vector<8x1xf32>
    %312 = vector.broadcast %311 : vector<8x1xf32> to vector<8x16xf32>
    %313 = arith.mulf %308, %312 : vector<8x16xf32>
    %314 = arith.truncf %313 : vector<8x16xf32> to vector<8x16xbf16>
    %cst_102 = arith.constant dense<0.000000e+00> : vector<8x8xf32>
    %315 = tpu.matmul %314, %299, %cst_102 {dimension_numbers = #tpu.dot_dimension_numbers<[1], [0], [0], [1], [0, 0, 1, 1], [], []>} : vector<8x16xbf16>, vector<16x8xbf16>, vector<8x8xf32> -> vector<8x8xf32>
    %316 = vector.extract_strided_slice %297 {offsets = [0, 8], sizes = [16, 8], strides = [1, 1]} : vector<16x64xbf16> to vector<16x8xbf16>
    %317 = vector.extract_strided_slice %297 {offsets = [0, 40], sizes = [16, 8], strides = [1, 1]} : vector<16x64xbf16> to vector<16x8xbf16>
    %318 = vector.extract_strided_slice %296 {offsets = [0, 8], sizes = [8, 8], strides = [1, 1]} : vector<8x32xbf16> to vector<8x8xbf16>
    %cst_103 = arith.constant dense<0.000000e+00> : vector<8x16xf32>
    %319 = tpu.matmul %318, %316, %cst_103 {dimension_numbers = #tpu.dot_dimension_numbers<[1], [1], [0], [0], [0, 0, 1, 0], [], []>} : vector<8x8xbf16>, vector<16x8xbf16>, vector<8x16xf32> -> vector<8x16xf32>
    %320 = vector.broadcast %293 : vector<1x16xf32> to vector<8x16xf32>
    %321 = arith.addf %319, %320 : vector<8x16xf32>
    %cst_104 = arith.constant dense<0xFF800000> : vector<8xf32>
    %322 = vector.multi_reduction <maximumf>, %321, %cst_104 [1] : vector<8x16xf32> to vector<8xf32>
    %323 = vector.shape_cast %322 : vector<8xf32> to vector<8x1xf32>
    %324 = vector.broadcast %323 : vector<8x1xf32> to vector<8x16xf32>
    %325 = arith.subf %321, %324 : vector<8x16xf32>
    %326 = math.exp %325 : vector<8x16xf32>
    %cst_105 = arith.constant dense<0.000000e+00> : vector<8xf32>
    %327 = vector.multi_reduction <add>, %326, %cst_105 [1] : vector<8x16xf32> to vector<8xf32>
    %328 = vector.shape_cast %327 : vector<8xf32> to vector<8x1xf32>
    %329 = tpu.reciprocal %328 {approx = true} : vector<8x1xf32> -> vector<8x1xf32>
    %330 = vector.broadcast %329 : vector<8x1xf32> to vector<8x16xf32>
    %331 = arith.mulf %326, %330 : vector<8x16xf32>
    %332 = arith.truncf %331 : vector<8x16xf32> to vector<8x16xbf16>
    %cst_106 = arith.constant dense<0.000000e+00> : vector<8x8xf32>
    %333 = tpu.matmul %332, %317, %cst_106 {dimension_numbers = #tpu.dot_dimension_numbers<[1], [0], [0], [1], [0, 0, 1, 1], [], []>} : vector<8x16xbf16>, vector<16x8xbf16>, vector<8x8xf32> -> vector<8x8xf32>
    %334 = vector.extract_strided_slice %297 {offsets = [0, 16], sizes = [16, 8], strides = [1, 1]} : vector<16x64xbf16> to vector<16x8xbf16>
    %335 = vector.extract_strided_slice %297 {offsets = [0, 48], sizes = [16, 8], strides = [1, 1]} : vector<16x64xbf16> to vector<16x8xbf16>
    %336 = vector.extract_strided_slice %296 {offsets = [0, 16], sizes = [8, 8], strides = [1, 1]} : vector<8x32xbf16> to vector<8x8xbf16>
    %cst_107 = arith.constant dense<0.000000e+00> : vector<8x16xf32>
    %337 = tpu.matmul %336, %334, %cst_107 {dimension_numbers = #tpu.dot_dimension_numbers<[1], [1], [0], [0], [0, 0, 1, 0], [], []>} : vector<8x8xbf16>, vector<16x8xbf16>, vector<8x16xf32> -> vector<8x16xf32>
    %338 = vector.broadcast %293 : vector<1x16xf32> to vector<8x16xf32>
    %339 = arith.addf %337, %338 : vector<8x16xf32>
    %cst_108 = arith.constant dense<0xFF800000> : vector<8xf32>
    %340 = vector.multi_reduction <maximumf>, %339, %cst_108 [1] : vector<8x16xf32> to vector<8xf32>
    %341 = vector.shape_cast %340 : vector<8xf32> to vector<8x1xf32>
    %342 = vector.broadcast %341 : vector<8x1xf32> to vector<8x16xf32>
    %343 = arith.subf %339, %342 : vector<8x16xf32>
    %344 = math.exp %343 : vector<8x16xf32>
    %cst_109 = arith.constant dense<0.000000e+00> : vector<8xf32>
    %345 = vector.multi_reduction <add>, %344, %cst_109 [1] : vector<8x16xf32> to vector<8xf32>
    %346 = vector.shape_cast %345 : vector<8xf32> to vector<8x1xf32>
    %347 = tpu.reciprocal %346 {approx = true} : vector<8x1xf32> -> vector<8x1xf32>
    %348 = vector.broadcast %347 : vector<8x1xf32> to vector<8x16xf32>
    %349 = arith.mulf %344, %348 : vector<8x16xf32>
    %350 = arith.truncf %349 : vector<8x16xf32> to vector<8x16xbf16>
    %cst_110 = arith.constant dense<0.000000e+00> : vector<8x8xf32>
    %351 = tpu.matmul %350, %335, %cst_110 {dimension_numbers = #tpu.dot_dimension_numbers<[1], [0], [0], [1], [0, 0, 1, 1], [], []>} : vector<8x16xbf16>, vector<16x8xbf16>, vector<8x8xf32> -> vector<8x8xf32>
    %352 = vector.extract_strided_slice %297 {offsets = [0, 24], sizes = [16, 8], strides = [1, 1]} : vector<16x64xbf16> to vector<16x8xbf16>
    %353 = vector.extract_strided_slice %297 {offsets = [0, 56], sizes = [16, 8], strides = [1, 1]} : vector<16x64xbf16> to vector<16x8xbf16>
    %354 = vector.extract_strided_slice %296 {offsets = [0, 24], sizes = [8, 8], strides = [1, 1]} : vector<8x32xbf16> to vector<8x8xbf16>
    %cst_111 = arith.constant dense<0.000000e+00> : vector<8x16xf32>
    %355 = tpu.matmul %354, %352, %cst_111 {dimension_numbers = #tpu.dot_dimension_numbers<[1], [1], [0], [0], [0, 0, 1, 0], [], []>} : vector<8x8xbf16>, vector<16x8xbf16>, vector<8x16xf32> -> vector<8x16xf32>
    %356 = vector.broadcast %293 : vector<1x16xf32> to vector<8x16xf32>
    %357 = arith.addf %355, %356 : vector<8x16xf32>
    %cst_112 = arith.constant dense<0xFF800000> : vector<8xf32>
    %358 = vector.multi_reduction <maximumf>, %357, %cst_112 [1] : vector<8x16xf32> to vector<8xf32>
    %359 = vector.shape_cast %358 : vector<8xf32> to vector<8x1xf32>
    %360 = vector.broadcast %359 : vector<8x1xf32> to vector<8x16xf32>
    %361 = arith.subf %357, %360 : vector<8x16xf32>
    %362 = math.exp %361 : vector<8x16xf32>
    %cst_113 = arith.constant dense<0.000000e+00> : vector<8xf32>
    %363 = vector.multi_reduction <add>, %362, %cst_113 [1] : vector<8x16xf32> to vector<8xf32>
    %364 = vector.shape_cast %363 : vector<8xf32> to vector<8x1xf32>
    %365 = tpu.reciprocal %364 {approx = true} : vector<8x1xf32> -> vector<8x1xf32>
    %366 = vector.broadcast %365 : vector<8x1xf32> to vector<8x16xf32>
    %367 = arith.mulf %362, %366 : vector<8x16xf32>
    %368 = arith.truncf %367 : vector<8x16xf32> to vector<8x16xbf16>
    %cst_114 = arith.constant dense<0.000000e+00> : vector<8x8xf32>
    %369 = tpu.matmul %368, %353, %cst_114 {dimension_numbers = #tpu.dot_dimension_numbers<[1], [0], [0], [1], [0, 0, 1, 1], [], []>} : vector<8x16xbf16>, vector<16x8xbf16>, vector<8x8xf32> -> vector<8x8xf32>
    %370 = tpu.concatenate %315, %333, %351, %369 in 1 : vector<8x8xf32>, vector<8x8xf32>, vector<8x8xf32>, vector<8x8xf32> -> vector<8x32xf32>
    %371 = tpu.concatenate %284, %370 in 0 : vector<8x32xf32>, vector<8x32xf32> -> vector<16x32xf32>
    %372 = arith.truncf %371 : vector<16x32xf32> to vector<16x32xbf16>
    %c0_115 = arith.constant 0 : index
    %c0_116 = arith.constant 0 : index
    %373 = vector.load %arg8[%c0_115, %c0_116] : memref<32x32xbf16, #tpu.memory_space<vmem>>, vector<32x32xbf16>
    %cst_117 = arith.constant dense<0.000000e+00> : vector<16x32xf32>
    %374 = tpu.matmul %372, %373, %cst_117 {dimension_numbers = #tpu.dot_dimension_numbers<[1], [0], [0], [1], [0, 0, 1, 1], [], []>} : vector<16x32xbf16>, vector<32x32xbf16>, vector<16x32xf32> -> vector<16x32xf32>
    %375 = vector.broadcast %6 : vector<1x32xf32> to vector<16x32xf32>
    %376 = arith.addf %374, %375 : vector<16x32xf32>
    %377 = arith.addf %376, %193 : vector<16x32xf32>
    %cst_118 = arith.constant dense<0.000000e+00> : vector<16xf32>
    %378 = vector.multi_reduction <add>, %377, %cst_118 [1] : vector<16x32xf32> to vector<16xf32>
    %379 = vector.shape_cast %378 : vector<16xf32> to vector<16x1xf32>
    %cst_119 = arith.constant 3.200000e+01 : f32
    %380 = vector.broadcast %cst_119 : f32 to vector<16x1xf32>
    %381 = arith.divf %379, %380 : vector<16x1xf32>
    %382 = vector.broadcast %381 : vector<16x1xf32> to vector<16x32xf32>
    %383 = arith.subf %377, %382 : vector<16x32xf32>
    %384 = arith.mulf %383, %383 : vector<16x32xf32>
    %cst_120 = arith.constant dense<0.000000e+00> : vector<16xf32>
    %385 = vector.multi_reduction <add>, %384, %cst_120 [1] : vector<16x32xf32> to vector<16xf32>
    %386 = vector.shape_cast %385 : vector<16xf32> to vector<16x1xf32>
    %cst_121 = arith.constant 3.200000e+01 : f32
    %387 = vector.broadcast %cst_121 : f32 to vector<16x1xf32>
    %388 = arith.divf %386, %387 : vector<16x1xf32>
    %389 = vector.broadcast %381 : vector<16x1xf32> to vector<16x32xf32>
    %390 = arith.subf %377, %389 : vector<16x32xf32>
    %cst_122 = arith.constant 9.99999996E-13 : f32
    %391 = vector.broadcast %cst_122 : f32 to vector<16x1xf32>
    %392 = arith.addf %388, %391 : vector<16x1xf32>
    %393 = math.rsqrt %392 : vector<16x1xf32>
    %394 = vector.broadcast %393 : vector<16x1xf32> to vector<16x32xf32>
    %395 = arith.mulf %390, %394 : vector<16x32xf32>
    %396 = vector.broadcast %7 : vector<1x32xf32> to vector<16x32xf32>
    %397 = arith.mulf %395, %396 : vector<16x32xf32>
    %398 = vector.broadcast %8 : vector<1x32xf32> to vector<16x32xf32>
    %399 = arith.addf %397, %398 : vector<16x32xf32>
    %400 = arith.truncf %399 : vector<16x32xf32> to vector<16x32xbf16>
    %c0_123 = arith.constant 0 : index
    %c0_124 = arith.constant 0 : index
    %401 = vector.load %arg9[%c0_123, %c0_124] : memref<32x64xbf16, #tpu.memory_space<vmem>>, vector<32x64xbf16>
    %cst_125 = arith.constant dense<0.000000e+00> : vector<16x64xf32>
    %402 = tpu.matmul %400, %401, %cst_125 {dimension_numbers = #tpu.dot_dimension_numbers<[1], [0], [0], [1], [0, 0, 1, 1], [], []>} : vector<16x32xbf16>, vector<32x64xbf16>, vector<16x64xf32> -> vector<16x64xf32>
    %403 = vector.broadcast %9 : vector<1x64xf32> to vector<16x64xf32>
    %404 = arith.addf %402, %403 : vector<16x64xf32>
    %cst_126 = arith.constant 5.000000e-01 : f32
    %405 = vector.broadcast %cst_126 : f32 to vector<16x64xf32>
    %406 = arith.mulf %405, %404 : vector<16x64xf32>
    %cst_127 = arith.constant 4.471500e-02 : f32
    %407 = vector.broadcast %cst_127 : f32 to vector<16x64xf32>
    %408 = arith.mulf %407, %404 : vector<16x64xf32>
    %409 = arith.mulf %408, %404 : vector<16x64xf32>
    %410 = arith.mulf %409, %404 : vector<16x64xf32>
    %411 = arith.addf %404, %410 : vector<16x64xf32>
    %cst_128 = arith.constant 0.797884583 : f32
    %412 = vector.broadcast %cst_128 : f32 to vector<16x64xf32>
    %413 = arith.mulf %412, %411 : vector<16x64xf32>
    %414 = math.tanh %413 : vector<16x64xf32>
    %cst_129 = arith.constant 1.000000e+00 : f32
    %415 = vector.broadcast %cst_129 : f32 to vector<16x64xf32>
    %416 = arith.addf %415, %414 : vector<16x64xf32>
    %417 = arith.mulf %406, %416 : vector<16x64xf32>
    %418 = arith.truncf %417 : vector<16x64xf32> to vector<16x64xbf16>
    %c0_130 = arith.constant 0 : index
    %c0_131 = arith.constant 0 : index
    %419 = vector.load %arg10[%c0_130, %c0_131] : memref<64x32xbf16, #tpu.memory_space<vmem>>, vector<64x32xbf16>
    %cst_132 = arith.constant dense<0.000000e+00> : vector<16x32xf32>
    %420 = tpu.matmul %418, %419, %cst_132 {dimension_numbers = #tpu.dot_dimension_numbers<[1], [0], [0], [1], [0, 0, 1, 1], [], []>} : vector<16x64xbf16>, vector<64x32xbf16>, vector<16x32xf32> -> vector<16x32xf32>
    %421 = vector.broadcast %10 : vector<1x32xf32> to vector<16x32xf32>
    %422 = arith.addf %420, %421 : vector<16x32xf32>
    %423 = arith.addf %422, %399 : vector<16x32xf32>
    %cst_133 = arith.constant dense<0.000000e+00> : vector<16xf32>
    %424 = vector.multi_reduction <add>, %423, %cst_133 [1] : vector<16x32xf32> to vector<16xf32>
    %425 = vector.shape_cast %424 : vector<16xf32> to vector<16x1xf32>
    %cst_134 = arith.constant 3.200000e+01 : f32
    %426 = vector.broadcast %cst_134 : f32 to vector<16x1xf32>
    %427 = arith.divf %425, %426 : vector<16x1xf32>
    %428 = vector.broadcast %427 : vector<16x1xf32> to vector<16x32xf32>
    %429 = arith.subf %423, %428 : vector<16x32xf32>
    %430 = arith.mulf %429, %429 : vector<16x32xf32>
    %cst_135 = arith.constant dense<0.000000e+00> : vector<16xf32>
    %431 = vector.multi_reduction <add>, %430, %cst_135 [1] : vector<16x32xf32> to vector<16xf32>
    %432 = vector.shape_cast %431 : vector<16xf32> to vector<16x1xf32>
    %cst_136 = arith.constant 3.200000e+01 : f32
    %433 = vector.broadcast %cst_136 : f32 to vector<16x1xf32>
    %434 = arith.divf %432, %433 : vector<16x1xf32>
    %435 = vector.broadcast %427 : vector<16x1xf32> to vector<16x32xf32>
    %436 = arith.subf %423, %435 : vector<16x32xf32>
    %cst_137 = arith.constant 9.99999996E-13 : f32
    %437 = vector.broadcast %cst_137 : f32 to vector<16x1xf32>
    %438 = arith.addf %434, %437 : vector<16x1xf32>
    %439 = math.rsqrt %438 : vector<16x1xf32>
    %440 = vector.broadcast %439 : vector<16x1xf32> to vector<16x32xf32>
    %441 = arith.mulf %436, %440 : vector<16x32xf32>
    %442 = vector.broadcast %11 : vector<1x32xf32> to vector<16x32xf32>
    %443 = arith.mulf %441, %442 : vector<16x32xf32>
    %444 = vector.broadcast %12 : vector<1x32xf32> to vector<16x32xf32>
    %445 = arith.addf %443, %444 : vector<16x32xf32>
    %446 = vector.shape_cast %445 : vector<16x32xf32> to vector<2x8x32xf32>
    %447 = arith.truncf %446 : vector<2x8x32xf32> to vector<2x8x32xbf16>
    %c0_138 = arith.constant 0 : index
    %c0_139 = arith.constant 0 : index
    %c0_140 = arith.constant 0 : index
    %448 = vector.load %arg12[%c0_138, %c0_139, %c0_140] : memref<2x8x32xbf16, #tpu.memory_space<vmem>>, vector<2x8x32xbf16>
    tpu.vector_store %arg12[%c0_138, %c0_139, %c0_140], %447 {strides = array<i32>} : memref<2x8x32xbf16, #tpu.memory_space<vmem>>, vector<2x8x32xbf16>,
    return
  }
  func.func @transform_0(%arg0: i32) -> (i32, i32, i32) {
    %c0_i32 = arith.constant 0 : i32
    %c0_i32_0 = arith.constant 0 : i32
    %c0_i32_1 = arith.constant 0 : i32
    return %arg0, %c0_i32, %c0_i32_0 : i32, i32, i32
  }
  func.func @transform_1(%arg0: i32) -> (i32, i32, i32) {
    %c0_i32 = arith.constant 0 : i32
    %c0_i32_0 = arith.constant 0 : i32
    %c0_i32_1 = arith.constant 0 : i32
    return %arg0, %c0_i32, %c0_i32_0 : i32, i32, i32
  }
  func.func @transform_2(%arg0: i32) -> (i32, i32, i32) {
    %c0_i32 = arith.constant 0 : i32
    %c0_i32_0 = arith.constant 0 : i32
    %c0_i32_1 = arith.constant 0 : i32
    return %arg0, %c0_i32, %c0_i32_0 : i32, i32, i32
  }
  func.func @transform_3(%arg0: i32) -> (i32, i32) {
    %c0_i32 = arith.constant 0 : i32
    %c0_i32_0 = arith.constant 0 : i32
    %c0_i32_1 = arith.constant 0 : i32
    return %c0_i32, %c0_i32_0 : i32, i32
  }
  func.func @transform_4(%arg0: i32) -> (i32, i32) {
    %c0_i32 = arith.constant 0 : i32
    %c0_i32_0 = arith.constant 0 : i32
    %c0_i32_1 = arith.constant 0 : i32
    return %c0_i32, %c0_i32_0 : i32, i32
  }
  func.func @transform_5(%arg0: i32) -> (i32, i32) {
    %c0_i32 = arith.constant 0 : i32
    %c0_i32_0 = arith.constant 0 : i32
    %c0_i32_1 = arith.constant 0 : i32
    return %c0_i32, %c0_i32_0 : i32, i32
  }
  func.func @transform_6(%arg0: i32) -> (i32, i32) {
    %c0_i32 = arith.constant 0 : i32
    %c0_i32_0 = arith.constant 0 : i32
    %c0_i32_1 = arith.constant 0 : i32
    return %c0_i32, %c0_i32_0 : i32, i32
  }
  func.func @transform_7(%arg0: i32) -> (i32, i32) {
    %c0_i32 = arith.constant 0 : i32
    %c0_i32_0 = arith.constant 0 : i32
    %c0_i32_1 = arith.constant 0 : i32
    return %c0_i32, %c0_i32_0 : i32, i32
  }
  func.func @transform_8(%arg0: i32) -> (i32, i32) {
    %c0_i32 = arith.constant 0 : i32
    %c0_i32_0 = arith.constant 0 : i32
    %c0_i32_1 = arith.constant 0 : i32
    return %c0_i32, %c0_i32_0 : i32, i32
  }
  func.func @transform_9(%arg0: i32) -> (i32, i32) {
    %c0_i32 = arith.constant 0 : i32
    %c0_i32_0 = arith.constant 0 : i32
    %c0_i32_1 = arith.constant 0 : i32
    return %c0_i32, %c0_i32_0 : i32, i32
  }
  func.func @transform_10(%arg0: i32) -> (i32, i32) {
    %c0_i32 = arith.constant 0 : i32
    %c0_i32_0 = arith.constant 0 : i32
    %c0_i32_1 = arith.constant 0 : i32
    return %c0_i32, %c0_i32_0 : i32, i32
  }
  func.func @transform_11(%arg0: i32) -> (i32, i32, i32) {
    %c0_i32 = arith.constant 0 : i32
    %c0_i32_0 = arith.constant 0 : i32
    %c0_i32_1 = arith.constant 0 : i32
    return %arg0, %c0_i32, %c0_i32_0 : i32, i32, i32
  }
}

</mosaic_0001>

<llo_original>
// kernel: tpu_custom_call.1
$region0: #{tpu_custom_call.1}
  #allocation0 [shape = 'u32[]', space=smem, size = 0x4, offset = 0x4, fixed_abs, tag = 'smem constant byte address 0x4 - core index']
  #allocation1 [shape = 'u32[72,128]{1,0:T(1,128)}', space=vmem, size = 0x9000, scoped, tag = 'internal scratch']
  %s0 = inlined_call_operand.hbm [shape: bf16[2,8,32], index: 0, kind: input, shape index: {}]
  %s1 = inlined_call_operand.vmem [shape: bf16[2,16,32], index: 1, kind: input, shape index: {}]
  %s2 = inlined_call_operand.hbm [shape: f32[2,1,16], index: 2, kind: input, shape index: {}]
  %s3 = inlined_call_operand.vmem [shape: bf16[32,96], index: 3, kind: input, shape index: {}]
  %s4 = inlined_call_operand.vmem [shape: bf16[32,32], index: 4, kind: input, shape index: {}]
  %s5 = inlined_call_operand.hbm [shape: bf16[32,32], index: 5, kind: input, shape index: {}]
  %s6 = inlined_call_operand.hbm [shape: bf16[32,64], index: 6, kind: input, shape index: {}]
  %s7 = inlined_call_operand.hbm [shape: bf16[32,32], index: 7, kind: input, shape index: {}]
  %s8 = inlined_call_operand.hbm [shape: bf16[32,64], index: 8, kind: input, shape index: {}]
  %s9 = inlined_call_operand.vmem [shape: bf16[64,32], index: 9, kind: input, shape index: {}]
  %s10 = inlined_call_operand.hbm [shape: f32[13,96], index: 10, kind: input, shape index: {}]
  %s11 = inlined_call_operand.hbm [shape: bf16[2,8,32], index: 11, kind: output, shape index: {}]
  %s12 = sld [smem:[#allocation0]]
  $region82: #{tpu_custom_call.1} parent=0
    _
  %s14 = ssub.s32 1, %s12
  %s15 = scalar_select 0, %s14, %s12
  $region1: #{tpu_custom_call.1} parent=0
    #allocation2 [shape = 'u8[4096]{0}', space=vmem, size = 0x1000, scoped, tag = 'input window, operand 0, single buffered']
    #allocation3 [shape = 's32[1]{0}', space=sflag, size = 0x4, scoped, tag = 'scoped memory for tpu_custom_call.1']
    #allocation4 [shape = 's32[1]{0}', space=sflag, size = 0x4, scoped, tag = 'scoped memory for tpu_custom_call.1']
    #allocation5 [shape = 'u8[1024]{0}', space=vmem, size = 0x400, scoped, tag = 'input window, operand 2, single buffered']
    #allocation6 [shape = 's32[1]{0}', space=sflag, size = 0x4, scoped, tag = 'scoped memory for tpu_custom_call.1']
    #allocation7 [shape = 'u8[8192]{0}', space=vmem, size = 0x2000, scoped, tag = 'input window, operand 5, single buffered']
    #allocation8 [shape = 'u8[8192]{0}', space=vmem, size = 0x2000, scoped, tag = 'input window, operand 6, single buffered']
    #allocation9 [shape = 's32[1]{0}', space=sflag, size = 0x4, scoped, tag = 'scoped memory for tpu_custom_call.1']
    #allocation10 [shape = 'u8[8192]{0}', space=vmem, size = 0x2000, scoped, tag = 'input window, operand 7, single buffered']
    #allocation11 [shape = 'u8[8192]{0}', space=vmem, size = 0x2000, scoped, tag = 'input window, operand 8, single buffered']
    #allocation12 [shape = 's32[1]{0}', space=sflag, size = 0x4, scoped, tag = 'scoped memory for tpu_custom_call.1']
    #allocation13 [shape = 'u8[8192]{0}', space=vmem, size = 0x2000, scoped, tag = 'input window, operand 10, single buffered']
    #allocation14 [shape = 'u8[4096]{0}', space=vmem, size = 0x1000, scoped, tag = 'output window, operand 0, single buffered']
    %16 = vsyncpa [#allocation3], 0
    %17 = vsyncpa [#allocation6], 0
    %18 = vsyncpa [#allocation9], 0
    %19 = vsyncpa [#allocation12], 0
    %20 = vsyncpa [#allocation4], 0
    // Predicated region
    $region2: #{tpu_custom_call.1} parent=1 // pred_check
      _
    $region3: #{tpu_custom_call.1} parent=1 // pred_check_branch
      %22 = sbr.rel (0) target = $region5
    $region4: #{tpu_custom_call.1} parent=1 // pred_region
      %24 = vsyncadd [#allocation3], 0
      %s25 = sshll.u32 %s0, 4
      %s26 = int_to_ptr.hbm [resolvable:$true] %s25
      %s27 = sshll.u32 [#allocation2], 4
      %s28 = int_to_ptr.vmem [resolvable:$true] %s27
      %33 = dma.hbm_to_vmem [thread:$0]  %s26, 128, %s28, [#allocation3], 64, 64, 4
    $region5: #{tpu_custom_call.1} parent=1 // pred_fallthru
      _
    // Predicated region
    $region6: #{tpu_custom_call.1} parent=1 // pred_check
      _
    $region7: #{tpu_custom_call.1} parent=1 // pred_check_branch
      %35 = sbr.rel (0) target = $region9
    $region8: #{tpu_custom_call.1} parent=1 // pred_region
      _
    $region9: #{tpu_custom_call.1} parent=1 // pred_fallthru
      _
    // Predicated region
    $region10: #{tpu_custom_call.1} parent=1 // pred_check
      _
    $region11: #{tpu_custom_call.1} parent=1 // pred_check_branch
      %37 = sbr.rel (0) target = $region13
    $region12: #{tpu_custom_call.1} parent=1 // pred_region
      %39 = vsyncadd [#allocation6], 0
      %s40 = sshll.u32 %s2, 4
      %s41 = int_to_ptr.hbm [resolvable:$true] %s40
      %s42 = sshll.u32 [#allocation5], 4
      %s43 = int_to_ptr.vmem [resolvable:$true] %s42
      %48 = dma.hbm_to_vmem [thread:$0]  %s41, 32, %s43, [#allocation6], 16, 16, 1
    $region13: #{tpu_custom_call.1} parent=1 // pred_fallthru
      _
    // Predicated region
    $region14: #{tpu_custom_call.1} parent=1 // pred_check
      _
    $region15: #{tpu_custom_call.1} parent=1 // pred_check_branch
      %50 = sbr.rel (0) target = $region17
    $region16: #{tpu_custom_call.1} parent=1 // pred_region
      _
    $region17: #{tpu_custom_call.1} parent=1 // pred_fallthru
      _
    // Predicated region
    $region18: #{tpu_custom_call.1} parent=1 // pred_check
      _
    $region19: #{tpu_custom_call.1} parent=1 // pred_check_branch
      %52 = sbr.rel (0) target = $region21
    $region20: #{tpu_custom_call.1} parent=1 // pred_region
      _
    $region21: #{tpu_custom_call.1} parent=1 // pred_fallthru
      _
    // Predicated region
    $region22: #{tpu_custom_call.1} parent=1 // pred_check
      _
    $region23: #{tpu_custom_call.1} parent=1 // pred_check_branch
      %54 = sbr.rel (0) target = $region25
    $region24: #{tpu_custom_call.1} parent=1 // pred_region
      %56 = vsyncadd [#allocation6], 0
      %s57 = sshll.u32 %s5, 4
      %s58 = int_to_ptr.hbm [resolvable:$true] %s57
      %s59 = sshll.u32 [#allocation7], 4
      %s60 = int_to_ptr.vmem [resolvable:$true] %s59
      %65 = dma.hbm_to_vmem [thread:$0]  %s58, 256, %s60, [#allocation6], 64, 64, 4
    $region25: #{tpu_custom_call.1} parent=1 // pred_fallthru
      _
    // Predicated region
    $region26: #{tpu_custom_call.1} parent=1 // pred_check
      _
    $region27: #{tpu_custom_call.1} parent=1 // pred_check_branch
      %67 = sbr.rel (0) target = $region29
    $region28: #{tpu_custom_call.1} parent=1 // pred_region
      %69 = vsyncadd [#allocation9], 0
      %s70 = sshll.u32 %s6, 4
      %s71 = int_to_ptr.hbm [resolvable:$true] %s70
      %s72 = sshll.u32 [#allocation8], 4
      %s73 = int_to_ptr.vmem [resolvable:$true] %s72
      %78 = dma.hbm_to_vmem [thread:$0]  %s71, 256, %s73, [#allocation9], 64, 64, 4
    $region29: #{tpu_custom_call.1} parent=1 // pred_fallthru
      _
    // Predicated region
    $region30: #{tpu_custom_call.1} parent=1 // pred_check
      _
    $region31: #{tpu_custom_call.1} parent=1 // pred_check_branch
      %80 = sbr.rel (0) target = $region33
    $region32: #{tpu_custom_call.1} parent=1 // pred_region
      %82 = vsyncadd [#allocation9], 0
      %s83 = sshll.u32 %s7, 4
      %s84 = int_to_ptr.hbm [resolvable:$true] %s83
      %s85 = sshll.u32 [#allocation10], 4
      %s86 = int_to_ptr.vmem [resolvable:$true] %s85
      %91 = dma.hbm_to_vmem [thread:$0]  %s84, 256, %s86, [#allocation9], 64, 64, 4
    $region33: #{tpu_custom_call.1} parent=1 // pred_fallthru
      _
    // Predicated region
    $region34: #{tpu_custom_call.1} parent=1 // pred_check
      _
    $region35: #{tpu_custom_call.1} parent=1 // pred_check_branch
      %93 = sbr.rel (0) target = $region37
    $region36: #{tpu_custom_call.1} parent=1 // pred_region
      %95 = vsyncadd [#allocation12], 0
      %s96 = sshll.u32 %s8, 4
      %s97 = int_to_ptr.hbm [resolvable:$true] %s96
      %s98 = sshll.u32 [#allocation11], 4
      %s99 = int_to_ptr.vmem [resolvable:$true] %s98
      %104 = dma.hbm_to_vmem [thread:$0]  %s97, 256, %s99, [#allocation12], 64, 64, 4
    $region37: #{tpu_custom_call.1} parent=1 // pred_fallthru
      _
    // Predicated region
    $region38: #{tpu_custom_call.1} parent=1 // pred_check
      _
    $region39: #{tpu_custom_call.1} parent=1 // pred_check_branch
      %106 = sbr.rel (0) target = $region41
    $region40: #{tpu_custom_call.1} parent=1 // pred_region
      _
    $region41: #{tpu_custom_call.1} parent=1 // pred_fallthru
      _
    // Predicated region
    $region42: #{tpu_custom_call.1} parent=1 // pred_check
      _
    $region43: #{tpu_custom_call.1} parent=1 // pred_check_branch
      %108 = sbr.rel (0) target = $region45
    $region44: #{tpu_custom_call.1} parent=1 // pred_region
      %110 = vsyncadd [#allocation12], 0
      %s111 = sshll.u32 %s10, 4
      %s112 = int_to_ptr.hbm [resolvable:$true] %s111
      %s113 = sshll.u32 [#allocation13], 4
      %s114 = int_to_ptr.vmem [resolvable:$true] %s113
      %119 = dma.hbm_to_vmem [thread:$0]  %s112, 256, %s114, [#allocation12], 128, 128, 8
    $region45: #{tpu_custom_call.1} parent=1 // pred_fallthru
      _
    // Predicated region
    $region46: #{tpu_custom_call.1} parent=1 // pred_check
      _
    $region47: #{tpu_custom_call.1} parent=1 // pred_check_branch
      %121 = sbr.rel (0) target = $region49
    $region48: #{tpu_custom_call.1} parent=1 // pred_region
      %123 = dma.done [#allocation3], 128
    $region49: #{tpu_custom_call.1} parent=1 // pred_fallthru
      _
    // Predicated region
    $region50: #{tpu_custom_call.1} parent=1 // pred_check
      _
    $region51: #{tpu_custom_call.1} parent=1 // pred_check_branch
      %125 = sbr.rel (0) target = $region53
    $region52: #{tpu_custom_call.1} parent=1 // pred_region
      %127 = dma.done [#allocation6], 32
    $region53: #{tpu_custom_call.1} parent=1 // pred_fallthru
      _
    // Predicated region
    $region54: #{tpu_custom_call.1} parent=1 // pred_check
      _
    $region55: #{tpu_custom_call.1} parent=1 // pred_check_branch
      %129 = sbr.rel (0) target = $region57
    $region56: #{tpu_custom_call.1} parent=1 // pred_region
      %131 = dma.done [#allocation6], 256
    $region57: #{tpu_custom_call.1} parent=1 // pred_fallthru
      _
    // Predicated region
    $region58: #{tpu_custom_call.1} parent=1 // pred_check
      _
    $region59: #{tpu_custom_call.1} parent=1 // pred_check_branch
      %133 = sbr.rel (0) target = $region61
    $region60: #{tpu_custom_call.1} parent=1 // pred_region
      %135 = dma.done [#allocation9], 256
    $region61: #{tpu_custom_call.1} parent=1 // pred_fallthru
      _
    // Predicated region
    $region62: #{tpu_custom_call.1} parent=1 // pred_check
      _
    $region63: #{tpu_custom_call.1} parent=1 // pred_check_branch
      %137 = sbr.rel (0) target = $region65
    $region64: #{tpu_custom_call.1} parent=1 // pred_region
      %139 = dma.done [#allocation9], 256
    $region65: #{tpu_custom_call.1} parent=1 // pred_fallthru
      _
    // Predicated region
    $region66: #{tpu_custom_call.1} parent=1 // pred_check
      _
    $region67: #{tpu_custom_call.1} parent=1 // pred_check_branch
      %141 = sbr.rel (0) target = $region69
    $region68: #{tpu_custom_call.1} parent=1 // pred_region
      %143 = dma.done [#allocation12], 256
    $region69: #{tpu_custom_call.1} parent=1 // pred_fallthru
      _
    // Predicated region
    $region70: #{tpu_custom_call.1} parent=1 // pred_check
      _
    $region71: #{tpu_custom_call.1} parent=1 // pred_check_branch
      %145 = sbr.rel (0) target = $region73
    $region72: #{tpu_custom_call.1} parent=1 // pred_region
      %147 = dma.done [#allocation12], 256
    $region73: #{tpu_custom_call.1} parent=1 // pred_fallthru
      _
    %v149 = vld [vmem:[#allocation13] sm:$0x1]
    %v150 = vld [vmem:[#allocation13 + $0x1] sm:$0x1]
    %v151 = vld [vmem:[#allocation13 + $0x2] sm:$0x1]
    %v152 = vld [vmem:[#allocation13 + $0x3] sm:$0x1]
    %v153 = vld [vmem:[#allocation13 + $0x4] sm:$0x1]
    %v154 = vld [vmem:[#allocation13 + $0x5] sm:$0x1]
    %v155 = vld [vmem:[#allocation13 + $0x6] sm:$0x1]
    %v156 = vld [vmem:[#allocation13 + $0x7] sm:$0x1]
    %v157 = vld [vmem:[#allocation13 + $0x8] sm:$0x1]
    %v158 = vld [vmem:[#allocation13 + $0x9] sm:$0x1]
    %v159 = vld [vmem:[#allocation13 + $0xa] sm:$0x1]
    %v160 = vld [vmem:[#allocation13 + $0xb] sm:$0x1]
    %v161 = vld [vmem:[#allocation13 + $0xc] sm:$0x1]
    %v162 = vld [vmem:[#allocation2] sm:$0xf]
    %v163 = vld [vmem:[#allocation2 + $0x4] sm:$0xf]
    %v164 = vunpack.c.l.bf16 %v162
    %v165 = vunpack.c.l.bf16 %v163
    %v166 = vpack.c.bf16 %v165, %v164
    %v167 = vld [vmem:[%s3] sm:$0xf]
    %v168 = vld [vmem:[%s3 + $0x4] sm:$0xf]
    %v169 = vld [vmem:[%s3 + $0x8] sm:$0xf]
    %v170 = vld [vmem:[%s3 + $0xc] sm:$0xf]
    %v171 = vperm.slane %v149, 0
    %v176 = vunpack.c.l.b16 %v167
    %v177 = vunpack.c.l.b16 %v168
    %v178 = vunpack.c.l.b16 %v169
    %v179 = vunpack.c.l.b16 %v170
    %v180 = vpack.c.b16 %v177, %v176
    %v181 = vpack.c.b16 %v179, %v178
    %vm184 = vcmask 261120
    %v186 = vsel %vm184, %v166, 0
    %188 = vmatpush.bf16.msra.mxu0 0
    %189 = vmatpush.bf16.msra.mxu0 0
    %190 = vmatpush.bf16.msra.mxu0 0
    %191 = vmatpush.bf16.msra.mxu0 0
    %192 = vmatpush.bf16.msra.mxu0 0
    %193 = vmatpush.bf16.msra.mxu0 0
    %194 = vmatpush.bf16.msra.mxu0 %v181
    %195 = vmatpush.bf16.msra.mxu0 %v180
    %196 = vmatmul.bf16.gmra.mxu0 %v186
    %v197 = vpop.f32.mrf.mxu0
    %v198 = vadd.f32 %v171, %v197
    %v199 = vpop.f32.mrf.mxu0
    %v200 = vadd.f32 %v171, %v199
    %201 = vdwg.mxu0
    %v202 = vmul.f32 %v198, 0.35355338
    %v203 = vpack.c.bf16 %v202, %v202
    %v204 = vpack.c.bf16 %v198, %v198
    %v206 = vunpack.c.l.b16 %v204
    %v207 = vpack.c.b16 %v206, %v206
    %208 = vrot.lane.b32.xlu0 %v207, 96
    %v209 = vpop.permute.xlu0 %208
    %vm210 = vcmask 64512
    %v212 = vsel %vm210, %v203, 0
    %v215 = vsel %vm210, %v209, 0
    %217 = vmatpush.bf16.xpose.msra.mxu0 0
    %218 = vmatpush.bf16.xpose.msra.mxu0 0
    %219 = vmatpush.bf16.xpose.msra.mxu0 0
    %220 = vmatpush.bf16.xpose.msra.mxu0 0
    %221 = vmatpush.bf16.xpose.msra.mxu0 0
    %222 = vmatpush.bf16.xpose.msra.mxu0 0
    %223 = vmatpush.bf16.xpose.msra.mxu0 0
    %224 = vmatpush.bf16.xpose.msra.mxu0 %v215
    %225 = vmatmul.bf16.gmra.mxu0 %v212
    %v226 = vpop.f32.mrf.mxu0
    %v227 = vadd.f32 0.0, %v226
    %v228 = vpop.f32.mrf.mxu0
    %229 = vdwg.mxu0
    %v230 = vsel %vm210, %v227, -inf
    %231 = vmax.xlane.f32.xlu0 %v230
    %v232 = vpop.xlane.xlu0 %231
    %v233 = vsub.f32 %v227, %v232
    %v234 = vmul.f32 %v233, 1.442695
    %v235 = vpow.pop %v234
    %v236 = vsel %vm210, %v235, 0.0
    %237 = vadd.xlane.f32.xlu0 %v236
    %v238 = vpop.xlane.xlu0 %237
    %v239 = vrcp.pop %v238
    %v240 = vmul.f32 %v235, %v239
    %v241 = vpack.c.bf16 %v240, %v240
    %242 = vrot.lane.b32.xlu0 %v207, 64
    %v243 = vpop.permute.xlu0 %242
    %v245 = vsel %vm210, %v241, 0
    %vm247 = vcmask 1043456
    %v249 = vsel %vm247, %v243, 0
    %251 = vmatpush.bf16.msra.mxu0 0
    %252 = vmatpush.bf16.msra.mxu0 0
    %253 = vmatpush.bf16.msra.mxu0 0
    %254 = vmatpush.bf16.msra.mxu0 0
    %255 = vmatpush.bf16.msra.mxu0 0
    %256 = vmatpush.bf16.msra.mxu0 0
    %257 = vmatpush.bf16.msra.mxu0 0
    %258 = vmatpush.bf16.msra.mxu0 %v249
    %259 = vmatmul.bf16.gmra.mxu0 %v245
    %v260 = vpop.f32.mrf.mxu0
    %v261 = vadd.f32 0.0, %v260
    %v262 = vpop.f32.mrf.mxu0
    %263 = vdwg.mxu0
    %v265 = vunpack.c.l.b16 %v203
    %v266 = vpack.c.b16 %v265, %v265
    %267 = vrot.lane.b32.xlu0 %v266, 120
    %v268 = vpop.permute.xlu0 %267
    %269 = vrot.lane.b32.xlu0 %v207, 88
    %v270 = vpop.permute.xlu0 %269
    %v272 = vsel %vm210, %v268, 0
    %v275 = vsel %vm210, %v270, 0
    %277 = vmatpush.bf16.xpose.msra.mxu0 0
    %278 = vmatpush.bf16.xpose.msra.mxu0 0
    %279 = vmatpush.bf16.xpose.msra.mxu0 0
    %280 = vmatpush.bf16.xpose.msra.mxu0 0
    %281 = vmatpush.bf16.xpose.msra.mxu0 0
    %282 = vmatpush.bf16.xpose.msra.mxu0 0
    %283 = vmatpush.bf16.xpose.msra.mxu0 0
    %284 = vmatpush.bf16.xpose.msra.mxu0 %v275
    %285 = vmatmul.bf16.gmra.mxu0 %v272
    %v286 = vpop.f32.mrf.mxu0
    %v287 = vadd.f32 0.0, %v286
    %v288 = vpop.f32.mrf.mxu0
    %289 = vdwg.mxu0
    %v290 = vsel %vm210, %v287, -inf
    %291 = vmax.xlane.f32.xlu0 %v290
    %v292 = vpop.xlane.xlu0 %291
    %v293 = vsub.f32 %v287, %v292
    %v294 = vmul.f32 %v293, 1.442695
    %v295 = vpow.pop %v294
    %v296 = vsel %vm210, %v295, 0.0
    %297 = vadd.xlane.f32.xlu0 %v296
    %v298 = vpop.xlane.xlu0 %297
    %v299 = vrcp.pop %v298
    %v300 = vmul.f32 %v295, %v299
    %v301 = vpack.c.bf16 %v300, %v300
    %302 = vrot.lane.b32.xlu0 %v207, 56
    %v303 = vpop.permute.xlu0 %302
    %v305 = vsel %vm210, %v301, 0
    %v308 = vsel %vm247, %v303, 0
    %310 = vmatpush.bf16.msra.mxu0 0
    %311 = vmatpush.bf16.msra.mxu0 0
    %312 = vmatpush.bf16.msra.mxu0 0
    %313 = vmatpush.bf16.msra.mxu0 0
    %314 = vmatpush.bf16.msra.mxu0 0
    %315 = vmatpush.bf16.msra.mxu0 0
    %316 = vmatpush.bf16.msra.mxu0 0
    %317 = vmatpush.bf16.msra.mxu0 %v308
    %318 = vmatmul.bf16.gmra.mxu0 %v305
    %v319 = vpop.f32.mrf.mxu0
    %v320 = vadd.f32 0.0, %v319
    %v321 = vpop.f32.mrf.mxu0
    %322 = vdwg.mxu0
    %323 = vrot.lane.b32.xlu0 %v266, 112
    %v324 = vpop.permute.xlu0 %323
    %325 = vrot.lane.b32.xlu0 %v207, 80
    %v326 = vpop.permute.xlu0 %325
    %v328 = vsel %vm210, %v324, 0
    %v331 = vsel %vm210, %v326, 0
    %333 = vmatpush.bf16.xpose.msra.mxu0 0
    %334 = vmatpush.bf16.xpose.msra.mxu0 0
    %335 = vmatpush.bf16.xpose.msra.mxu0 0
    %336 = vmatpush.bf16.xpose.msra.mxu0 0
    %337 = vmatpush.bf16.xpose.msra.mxu0 0
    %338 = vmatpush.bf16.xpose.msra.mxu0 0
    %339 = vmatpush.bf16.xpose.msra.mxu0 0
    %340 = vmatpush.bf16.xpose.msra.mxu0 %v331
    %341 = vmatmul.bf16.gmra.mxu0 %v328
    %v342 = vpop.f32.mrf.mxu0
    %v343 = vadd.f32 0.0, %v342
    %v344 = vpop.f32.mrf.mxu0
    %345 = vdwg.mxu0
    %v346 = vsel %vm210, %v343, -inf
    %347 = vmax.xlane.f32.xlu0 %v346
    %v348 = vpop.xlane.xlu0 %347
    %v349 = vsub.f32 %v343, %v348
    %v350 = vmul.f32 %v349, 1.442695
    %v351 = vpow.pop %v350
    %v352 = vsel %vm210, %v351, 0.0
    %353 = vadd.xlane.f32.xlu0 %v352
    %v354 = vpop.xlane.xlu0 %353
    %v355 = vrcp.pop %v354
    %v356 = vmul.f32 %v351, %v355
    %v357 = vpack.c.bf16 %v356, %v356
    %358 = vrot.lane.b32.xlu0 %v207, 48
    %v359 = vpop.permute.xlu0 %358
    %v361 = vsel %vm210, %v357, 0
    %v364 = vsel %vm247, %v359, 0
    %366 = vmatpush.bf16.msra.mxu0 0
    %367 = vmatpush.bf16.msra.mxu0 0
    %368 = vmatpush.bf16.msra.mxu0 0
    %369 = vmatpush.bf16.msra.mxu0 0
    %370 = vmatpush.bf16.msra.mxu0 0
    %371 = vmatpush.bf16.msra.mxu0 0
    %372 = vmatpush.bf16.msra.mxu0 0
    %373 = vmatpush.bf16.msra.mxu0 %v364
    %374 = vmatmul.bf16.gmra.mxu0 %v361
    %v375 = vpop.f32.mrf.mxu0
    %v376 = vadd.f32 0.0, %v375
    %v377 = vpop.f32.mrf.mxu0
    %378 = vdwg.mxu0
    %379 = vrot.lane.b32.xlu0 %v266, 104
    %v380 = vpop.permute.xlu0 %379
    %381 = vrot.lane.b32.xlu0 %v207, 72
    %v382 = vpop.permute.xlu0 %381
    %v384 = vsel %vm210, %v380, 0
    %v387 = vsel %vm210, %v382, 0
    %389 = vmatpush.bf16.xpose.msra.mxu0 0
    %390 = vmatpush.bf16.xpose.msra.mxu0 0
    %391 = vmatpush.bf16.xpose.msra.mxu0 0
    %392 = vmatpush.bf16.xpose.msra.mxu0 0
    %393 = vmatpush.bf16.xpose.msra.mxu0 0
    %394 = vmatpush.bf16.xpose.msra.mxu0 0
    %395 = vmatpush.bf16.xpose.msra.mxu0 0
    %396 = vmatpush.bf16.xpose.msra.mxu0 %v387
    %397 = vmatmul.bf16.gmra.mxu0 %v384
    %v398 = vpop.f32.mrf.mxu0
    %v399 = vadd.f32 0.0, %v398
    %v400 = vpop.f32.mrf.mxu0
    %401 = vdwg.mxu0
    %v402 = vsel %vm210, %v399, -inf
    %403 = vmax.xlane.f32.xlu0 %v402
    %v404 = vpop.xlane.xlu0 %403
    %v405 = vsub.f32 %v399, %v404
    %v406 = vmul.f32 %v405, 1.442695
    %v407 = vpow.pop %v406
    %v408 = vsel %vm210, %v407, 0.0
    %409 = vadd.xlane.f32.xlu0 %v408
    %v410 = vpop.xlane.xlu0 %409
    %v411 = vrcp.pop %v410
    %v412 = vmul.f32 %v407, %v411
    %v413 = vpack.c.bf16 %v412, %v412
    %414 = vrot.lane.b32.xlu0 %v207, 40
    %v415 = vpop.permute.xlu0 %414
    %v417 = vsel %vm210, %v413, 0
    %v420 = vsel %vm247, %v415, 0
    %422 = vmatpush.bf16.msra.mxu0 0
    %423 = vmatpush.bf16.msra.mxu0 0
    %424 = vmatpush.bf16.msra.mxu0 0
    %425 = vmatpush.bf16.msra.mxu0 0
    %426 = vmatpush.bf16.msra.mxu0 0
    %427 = vmatpush.bf16.msra.mxu0 0
    %428 = vmatpush.bf16.msra.mxu0 0
    %429 = vmatpush.bf16.msra.mxu0 %v420
    %430 = vmatmul.bf16.gmra.mxu0 %v417
    %v431 = vpop.f32.mrf.mxu0
    %v432 = vadd.f32 0.0, %v431
    %v433 = vpop.f32.mrf.mxu0
    %434 = vdwg.mxu0
    %436 = vrot.lane.b32.xlu0 %v320, 8
    %v437 = vpop.permute.xlu0 %436
    %440 = vrot.lane.b32.xlu0 %v376, 16
    %v441 = vpop.permute.xlu0 %440
    %444 = vrot.lane.b32.xlu0 %v432, 24
    %v445 = vpop.permute.xlu0 %444
    %v447 = vsel %vm210, %v261, %v437
    %vm448 = vcmask 130048
    %v449 = vsel %vm448, %v447, %v441
    %vm450 = vcmask 195584
    %v451 = vsel %vm450, %v449, %v445
    %v452 = vmul.f32 %v200, 0.35355338
    %v453 = vpack.c.bf16 %v452, %v452
    %v454 = vpack.c.bf16 %v200, %v200
    %v456 = vunpack.c.l.b16 %v454
    %v457 = vpack.c.b16 %v456, %v456
    %458 = vrot.lane.b32.xlu0 %v457, 96
    %v459 = vpop.permute.xlu0 %458
    %v461 = vsel %vm210, %v453, 0
    %v464 = vsel %vm210, %v459, 0
    %466 = vmatpush.bf16.xpose.msra.mxu0 0
    %467 = vmatpush.bf16.xpose.msra.mxu0 0
    %468 = vmatpush.bf16.xpose.msra.mxu0 0
    %469 = vmatpush.bf16.xpose.msra.mxu0 0
    %470 = vmatpush.bf16.xpose.msra.mxu0 0
    %471 = vmatpush.bf16.xpose.msra.mxu0 0
    %472 = vmatpush.bf16.xpose.msra.mxu0 0
    %473 = vmatpush.bf16.xpose.msra.mxu0 %v464
    %474 = vmatmul.bf16.gmra.mxu0 %v461
    %v475 = vpop.f32.mrf.mxu0
    %v476 = vadd.f32 0.0, %v475
    %v477 = vpop.f32.mrf.mxu0
    %478 = vdwg.mxu0
    %v479 = vsel %vm210, %v476, -inf
    %480 = vmax.xlane.f32.xlu0 %v479
    %v481 = vpop.xlane.xlu0 %480
    %v482 = vsub.f32 %v476, %v481
    %v483 = vmul.f32 %v482, 1.442695
    %v484 = vpow.pop %v483
    %v485 = vsel %vm210, %v484, 0.0
    %486 = vadd.xlane.f32.xlu0 %v485
    %v487 = vpop.xlane.xlu0 %486
    %v488 = vrcp.pop %v487
    %v489 = vmul.f32 %v484, %v488
    %v490 = vpack.c.bf16 %v489, %v489
    %491 = vrot.lane.b32.xlu0 %v457, 64
    %v492 = vpop.permute.xlu0 %491
    %v494 = vsel %vm210, %v490, 0
    %v497 = vsel %vm247, %v492, 0
    %499 = vmatpush.bf16.msra.mxu0 0
    %500 = vmatpush.bf16.msra.mxu0 0
    %501 = vmatpush.bf16.msra.mxu0 0
    %502 = vmatpush.bf16.msra.mxu0 0
    %503 = vmatpush.bf16.msra.mxu0 0
    %504 = vmatpush.bf16.msra.mxu0 0
    %505 = vmatpush.bf16.msra.mxu0 0
    %506 = vmatpush.bf16.msra.mxu0 %v497
    %507 = vmatmul.bf16.gmra.mxu0 %v494
    %v508 = vpop.f32.mrf.mxu0
    %v509 = vadd.f32 0.0, %v508
    %v510 = vpop.f32.mrf.mxu0
    %511 = vdwg.mxu0
    %v513 = vunpack.c.l.b16 %v453
    %v514 = vpack.c.b16 %v513, %v513
    %515 = vrot.lane.b32.xlu0 %v514, 120
    %v516 = vpop.permute.xlu0 %515
    %517 = vrot.lane.b32.xlu0 %v457, 88
    %v518 = vpop.permute.xlu0 %517
    %v520 = vsel %vm210, %v516, 0
    %v523 = vsel %vm210, %v518, 0
    %525 = vmatpush.bf16.xpose.msra.mxu0 0
    %526 = vmatpush.bf16.xpose.msra.mxu0 0
    %527 = vmatpush.bf16.xpose.msra.mxu0 0
    %528 = vmatpush.bf16.xpose.msra.mxu0 0
    %529 = vmatpush.bf16.xpose.msra.mxu0 0
    %530 = vmatpush.bf16.xpose.msra.mxu0 0
    %531 = vmatpush.bf16.xpose.msra.mxu0 0
    %532 = vmatpush.bf16.xpose.msra.mxu0 %v523
    %533 = vmatmul.bf16.gmra.mxu0 %v520
    %v534 = vpop.f32.mrf.mxu0
    %v535 = vadd.f32 0.0, %v534
    %v536 = vpop.f32.mrf.mxu0
    %537 = vdwg.mxu0
    %v538 = vsel %vm210, %v535, -inf
    %539 = vmax.xlane.f32.xlu0 %v538
    %v540 = vpop.xlane.xlu0 %539
    %v541 = vsub.f32 %v535, %v540
    %v542 = vmul.f32 %v541, 1.442695
    %v543 = vpow.pop %v542
    %v544 = vsel %vm210, %v543, 0.0
    %545 = vadd.xlane.f32.xlu0 %v544
    %v546 = vpop.xlane.xlu0 %545
    %v547 = vrcp.pop %v546
    %v548 = vmul.f32 %v543, %v547
    %v549 = vpack.c.bf16 %v548, %v548
    %550 = vrot.lane.b32.xlu0 %v457, 56
    %v551 = vpop.permute.xlu0 %550
    %v553 = vsel %vm210, %v549, 0
    %v556 = vsel %vm247, %v551, 0
    %558 = vmatpush.bf16.msra.mxu0 0
    %559 = vmatpush.bf16.msra.mxu0 0
    %560 = vmatpush.bf16.msra.mxu0 0
    %561 = vmatpush.bf16.msra.mxu0 0
    %562 = vmatpush.bf16.msra.mxu0 0
    %563 = vmatpush.bf16.msra.mxu0 0
    %564 = vmatpush.bf16.msra.mxu0 0
    %565 = vmatpush.bf16.msra.mxu0 %v556
    %566 = vmatmul.bf16.gmra.mxu0 %v553
    %v567 = vpop.f32.mrf.mxu0
    %v568 = vadd.f32 0.0, %v567
    %v569 = vpop.f32.mrf.mxu0
    %570 = vdwg.mxu0
    %571 = vrot.lane.b32.xlu0 %v514, 112
    %v572 = vpop.permute.xlu0 %571
    %573 = vrot.lane.b32.xlu0 %v457, 80
    %v574 = vpop.permute.xlu0 %573
    %v576 = vsel %vm210, %v572, 0
    %v579 = vsel %vm210, %v574, 0
    %581 = vmatpush.bf16.xpose.msra.mxu0 0
    %582 = vmatpush.bf16.xpose.msra.mxu0 0
    %583 = vmatpush.bf16.xpose.msra.mxu0 0
    %584 = vmatpush.bf16.xpose.msra.mxu0 0
    %585 = vmatpush.bf16.xpose.msra.mxu0 0
    %586 = vmatpush.bf16.xpose.msra.mxu0 0
    %587 = vmatpush.bf16.xpose.msra.mxu0 0
    %588 = vmatpush.bf16.xpose.msra.mxu0 %v579
    %589 = vmatmul.bf16.gmra.mxu0 %v576
    %v590 = vpop.f32.mrf.mxu0
    %v591 = vadd.f32 0.0, %v590
    %v592 = vpop.f32.mrf.mxu0
    %593 = vdwg.mxu0
    %v594 = vsel %vm210, %v591, -inf
    %595 = vmax.xlane.f32.xlu0 %v594
    %v596 = vpop.xlane.xlu0 %595
    %v597 = vsub.f32 %v591, %v596
    %v598 = vmul.f32 %v597, 1.442695
    %v599 = vpow.pop %v598
    %v600 = vsel %vm210, %v599, 0.0
    %601 = vadd.xlane.f32.xlu0 %v600
    %v602 = vpop.xlane.xlu0 %601
    %v603 = vrcp.pop %v602
    %v604 = vmul.f32 %v599, %v603
    %v605 = vpack.c.bf16 %v604, %v604
    %606 = vrot.lane.b32.xlu0 %v457, 48
    %v607 = vpop.permute.xlu0 %606
    %v609 = vsel %vm210, %v605, 0
    %v612 = vsel %vm247, %v607, 0
    %614 = vmatpush.bf16.msra.mxu0 0
    %615 = vmatpush.bf16.msra.mxu0 0
    %616 = vmatpush.bf16.msra.mxu0 0
    %617 = vmatpush.bf16.msra.mxu0 0
    %618 = vmatpush.bf16.msra.mxu0 0
    %619 = vmatpush.bf16.msra.mxu0 0
    %620 = vmatpush.bf16.msra.mxu0 0
    %621 = vmatpush.bf16.msra.mxu0 %v612
    %622 = vmatmul.bf16.gmra.mxu0 %v609
    %v623 = vpop.f32.mrf.mxu0
    %v624 = vadd.f32 0.0, %v623
    %v625 = vpop.f32.mrf.mxu0
    %626 = vdwg.mxu0
    %627 = vrot.lane.b32.xlu0 %v514, 104
    %v628 = vpop.permute.xlu0 %627
    %629 = vrot.lane.b32.xlu0 %v457, 72
    %v630 = vpop.permute.xlu0 %629
    %v632 = vsel %vm210, %v628, 0
    %v635 = vsel %vm210, %v630, 0
    %637 = vmatpush.bf16.xpose.msra.mxu0 0
    %638 = vmatpush.bf16.xpose.msra.mxu0 0
    %639 = vmatpush.bf16.xpose.msra.mxu0 0
    %640 = vmatpush.bf16.xpose.msra.mxu0 0
    %641 = vmatpush.bf16.xpose.msra.mxu0 0
    %642 = vmatpush.bf16.xpose.msra.mxu0 0
    %643 = vmatpush.bf16.xpose.msra.mxu0 0
    %644 = vmatpush.bf16.xpose.msra.mxu0 %v635
    %645 = vmatmul.bf16.gmra.mxu0 %v632
    %v646 = vpop.f32.mrf.mxu0
    %v647 = vadd.f32 0.0, %v646
    %v648 = vpop.f32.mrf.mxu0
    %649 = vdwg.mxu0
    %v650 = vsel %vm210, %v647, -inf
    %651 = vmax.xlane.f32.xlu0 %v650
    %v652 = vpop.xlane.xlu0 %651
    %v653 = vsub.f32 %v647, %v652
    %v654 = vmul.f32 %v653, 1.442695
    %v655 = vpow.pop %v654
    %v656 = vsel %vm210, %v655, 0.0
    %657 = vadd.xlane.f32.xlu0 %v656
    %v658 = vpop.xlane.xlu0 %657
    %v659 = vrcp.pop %v658
    %v660 = vmul.f32 %v655, %v659
    %v661 = vpack.c.bf16 %v660, %v660
    %662 = vrot.lane.b32.xlu0 %v457, 40
    %v663 = vpop.permute.xlu0 %662
    %v665 = vsel %vm210, %v661, 0
    %v668 = vsel %vm247, %v663, 0
    %670 = vmatpush.bf16.msra.mxu0 0
    %671 = vmatpush.bf16.msra.mxu0 0
    %672 = vmatpush.bf16.msra.mxu0 0
    %673 = vmatpush.bf16.msra.mxu0 0
    %674 = vmatpush.bf16.msra.mxu0 0
    %675 = vmatpush.bf16.msra.mxu0 0
    %676 = vmatpush.bf16.msra.mxu0 0
    %677 = vmatpush.bf16.msra.mxu0 %v668
    %678 = vmatmul.bf16.gmra.mxu0 %v665
    %v679 = vpop.f32.mrf.mxu0
    %v680 = vadd.f32 0.0, %v679
    %v681 = vpop.f32.mrf.mxu0
    %682 = vdwg.mxu0
    %684 = vrot.lane.b32.xlu0 %v568, 8
    %v685 = vpop.permute.xlu0 %684
    %688 = vrot.lane.b32.xlu0 %v624, 16
    %v689 = vpop.permute.xlu0 %688
    %692 = vrot.lane.b32.xlu0 %v680, 24
    %v693 = vpop.permute.xlu0 %692
    %v695 = vsel %vm210, %v509, %v685
    %v696 = vsel %vm448, %v695, %v689
    %v697 = vsel %vm450, %v696, %v693
    %v698 = vpack.c.bf16 %v697, %v451
    %v699 = vld [vmem:[%s4] sm:$0xf]
    %v700 = vld [vmem:[%s4 + $0x4] sm:$0xf]
    %v701 = vld [vmem:[%s4 + $0x8] sm:$0xf]
    %v702 = vld [vmem:[%s4 + $0xc] sm:$0xf]
    %v703 = vperm.slane %v150, 0
    %v708 = vunpack.c.l.b16 %v699
    %v709 = vunpack.c.l.b16 %v700
    %v710 = vunpack.c.l.b16 %v701
    %v711 = vunpack.c.l.b16 %v702
    %v712 = vpack.c.b16 %v709, %v708
    %v713 = vpack.c.b16 %v711, %v710
    %v717 = vsel %vm184, %v698, 0
    %719 = vmatpush.bf16.msra.mxu0 0
    %720 = vmatpush.bf16.msra.mxu0 0
    %721 = vmatpush.bf16.msra.mxu0 0
    %722 = vmatpush.bf16.msra.mxu0 0
    %723 = vmatpush.bf16.msra.mxu0 0
    %724 = vmatpush.bf16.msra.mxu0 0
    %725 = vmatpush.bf16.msra.mxu0 %v713
    %726 = vmatpush.bf16.msra.mxu0 %v712
    %727 = vmatmul.bf16.gmra.mxu0 %v717
    %v728 = vpop.f32.mrf.mxu0
    %v729 = vadd.f32 %v703, %v728
    %v730 = vpop.f32.mrf.mxu0
    %v731 = vadd.f32 %v703, %v730
    %732 = vdwg.mxu0
    %v733 = vadd.f32 %v729, %v164
    %v734 = vadd.f32 %v731, %v165
    %v735 = vsel %vm184, %v733, 0.0
    %736 = vadd.xlane.f32.xlu0 %v735
    %v737 = vpop.xlane.xlu0 %736
    %v738 = vsel %vm184, %v734, 0.0
    %739 = vadd.xlane.f32.xlu0 %v738
    %v740 = vpop.xlane.xlu0 %739
    %v741 = vrcp.pop 32.0
    %v742 = vmul.f32 32.0, %v741
    %v743 = vsub.f32 1.0, %v742
    %v744 = vmul.f32 %v741, %v743
    %v745 = vadd.f32 %v741, %v744
    %vm746 = vweird.f32 %v741
    %v747 = vsel %vm746, %v741, %v745
    %v748 = vmul.f32 %v737, %v747
    %v749 = vmul.f32 %v740, %v747
    %v750 = vsub.f32 %v733, %v748
    %v751 = vsub.f32 %v734, %v749
    %v752 = vmul.f32 %v750, %v750
    %v753 = vmul.f32 %v751, %v751
    %v754 = vsel %vm184, %v752, 0.0
    %755 = vadd.xlane.f32.xlu0 %v754
    %v756 = vpop.xlane.xlu0 %755
    %v757 = vsel %vm184, %v753, 0.0
    %758 = vadd.xlane.f32.xlu0 %v757
    %v759 = vpop.xlane.xlu0 %758
    %v760 = vmul.f32 %v756, %v747
    %v761 = vmul.f32 %v759, %v747
    %v762 = vadd.f32 %v760, 1e-12
    %v763 = vadd.f32 %v761, 1e-12
    %v764 = vrsqrt.pop %v762
    %v765 = vmul.f32 %v764, %v762
    %v766 = vmul.f32 %v765, %v764
    %v767 = vmul.f32 0.5, %v766
    %v768 = vsub.f32 1.5, %v767
    %v769 = vmul.f32 %v764, %v768
    %vm770 = vweird.f32 %v762
    %vm771 = vweird.f32 %v764
    %vm772 = vmor %vm770, %vm771
    %v773 = vsel %vm772, %v764, %v769
    %v774 = vrsqrt.pop %v763
    %v775 = vmul.f32 %v774, %v763
    %v776 = vmul.f32 %v775, %v774
    %v777 = vmul.f32 0.5, %v776
    %v778 = vsub.f32 1.5, %v777
    %v779 = vmul.f32 %v774, %v778
    %vm780 = vweird.f32 %v763
    %vm781 = vweird.f32 %v774
    %vm782 = vmor %vm780, %vm781
    %v783 = vsel %vm782, %v774, %v779
    %v784 = vmul.f32 %v750, %v773
    %v785 = vmul.f32 %v751, %v783
    %v786 = vperm.slane %v151, 0
    %v787 = vmul.f32 %v784, %v786
    %v788 = vmul.f32 %v785, %v786
    %v789 = vperm.slane %v152, 0
    %v790 = vadd.f32 %v787, %v789
    %v791 = vadd.f32 %v788, %v789
    %v792 = vpack.c.bf16 %v791, %v790
    %v793 = vld [vmem:[#allocation7] sm:$0xf]
    %v794 = vld [vmem:[#allocation7 + $0x4] sm:$0xf]
    %v795 = vld [vmem:[#allocation7 + $0x8] sm:$0xf]
    %v796 = vld [vmem:[#allocation7 + $0xc] sm:$0xf]
    %v797 = vperm.slane %v153, 0
    %v802 = vunpack.c.l.b16 %v793
    %v803 = vunpack.c.l.b16 %v794
    %v804 = vunpack.c.l.b16 %v795
    %v805 = vunpack.c.l.b16 %v796
    %v806 = vpack.c.b16 %v803, %v802
    %v807 = vpack.c.b16 %v805, %v804
    %v811 = vsel %vm184, %v792, 0
    %813 = vmatpush.bf16.msra.mxu0 0
    %814 = vmatpush.bf16.msra.mxu0 0
    %815 = vmatpush.bf16.msra.mxu0 0
    %816 = vmatpush.bf16.msra.mxu0 0
    %817 = vmatpush.bf16.msra.mxu0 0
    %818 = vmatpush.bf16.msra.mxu0 0
    %819 = vmatpush.bf16.msra.mxu0 %v807
    %820 = vmatpush.bf16.msra.mxu0 %v806
    %821 = vmatmul.bf16.gmra.mxu0 %v811
    %v822 = vpop.f32.mrf.mxu0
    %v823 = vadd.f32 %v797, %v822
    %v824 = vpop.f32.mrf.mxu0
    %v825 = vadd.f32 %v797, %v824
    %826 = vdwg.mxu0
    %v827 = vld [vmem:[%s1] sm:$0xf]
    %v828 = vld [vmem:[%s1 + $0x4] sm:$0xf]
    %v829 = vld [vmem:[#allocation8] sm:$0xf]
    %v830 = vld [vmem:[#allocation8 + $0x4] sm:$0xf]
    %v831 = vld [vmem:[#allocation8 + $0x8] sm:$0xf]
    %v832 = vld [vmem:[#allocation8 + $0xc] sm:$0xf]
    %v833 = vperm.slane %v154, 0
    %v836 = vunpack.c.l.b16 %v827
    %v837 = vunpack.c.l.b16 %v828
    %v838 = vpack.c.b16 %v837, %v836
    %v843 = vunpack.c.l.b16 %v829
    %v844 = vunpack.c.l.b16 %v830
    %v845 = vunpack.c.l.b16 %v831
    %v846 = vunpack.c.l.b16 %v832
    %v847 = vpack.c.b16 %v844, %v843
    %v848 = vpack.c.b16 %v846, %v845
    %v852 = vsel %vm184, %v838, 0
    %854 = vmatpush.bf16.msra.mxu0 0
    %855 = vmatpush.bf16.msra.mxu0 0
    %856 = vmatpush.bf16.msra.mxu0 0
    %857 = vmatpush.bf16.msra.mxu0 0
    %858 = vmatpush.bf16.msra.mxu0 0
    %859 = vmatpush.bf16.msra.mxu0 0
    %860 = vmatpush.bf16.msra.mxu0 %v848
    %861 = vmatpush.bf16.msra.mxu0 %v847
    %862 = vmatmul.bf16.gmra.mxu0 %v852
    %v863 = vpop.f32.mrf.mxu0
    %v864 = vadd.f32 %v833, %v863
    %v865 = vpop.f32.mrf.mxu0
    %v866 = vadd.f32 %v833, %v865
    %867 = vdwg.mxu0
    %v868 = vld [vmem:[#allocation5] sm:$0x1]
    %v869 = vmul.f32 %v823, 0.35355338
    %v870 = vpack.c.bf16 %v869, %v869
    %v871 = vpack.c.bf16 %v864, %v864
    %v872 = vpack.c.bf16 %v866, %v866
    %v874 = vperm.slane %v868, 0
    %v878 = vunpack.c.l.b16 %v871
    %v879 = vunpack.c.l.b16 %v872
    %v880 = vpack.c.b16 %v879, %v878
    %v882 = vsel %vm210, %v870, 0
    %v885 = vsel %vm210, %v880, 0
    %887 = vmatpush.bf16.xpose.msra.mxu0 0
    %888 = vmatpush.bf16.xpose.msra.mxu0 0
    %889 = vmatpush.bf16.xpose.msra.mxu0 0
    %890 = vmatpush.bf16.xpose.msra.mxu0 0
    %891 = vmatpush.bf16.xpose.msra.mxu0 0
    %892 = vmatpush.bf16.xpose.msra.mxu0 0
    %893 = vmatpush.bf16.xpose.msra.mxu0 0
    %894 = vmatpush.bf16.xpose.msra.mxu0 %v885
    %895 = vmatmul.bf16.gmra.mxu0 %v882
    %v896 = vpop.f32.mrf.mxu0
    %v897 = vadd.f32 %v874, %v896
    %v898 = vpop.f32.mrf.mxu0
    %899 = vdwg.mxu0
    %v900 = vsel %vm448, %v897, -inf
    %901 = vmax.xlane.f32.xlu0 %v900
    %v902 = vpop.xlane.xlu0 %901
    %v903 = vsub.f32 %v897, %v902
    %v904 = vmul.f32 %v903, 1.442695
    %v905 = vpow.pop %v904
    %v906 = vsel %vm448, %v905, 0.0
    %907 = vadd.xlane.f32.xlu0 %v906
    %v908 = vpop.xlane.xlu0 %907
    %v909 = vrcp.pop %v908
    %v910 = vmul.f32 %v905, %v909
    %v911 = vpack.c.bf16 %v910, %v910
    %912 = vrot.lane.b32.xlu0 %v880, 96
    %v913 = vpop.permute.xlu0 %912
    %v916 = vsel %vm448, %v911, 0
    %918 = vmatpush.bf16.msra.mxu0 0
    %919 = vmatpush.bf16.msra.mxu0 0
    %920 = vmatpush.bf16.msra.mxu0 0
    %921 = vmatpush.bf16.msra.mxu0 0
    %922 = vmatpush.bf16.msra.mxu0 0
    %923 = vmatpush.bf16.msra.mxu0 0
    %924 = vmatpush.bf16.msra.mxu0 0
    %925 = vmatpush.bf16.msra.mxu0 %v913
    %926 = vmatmul.bf16.gmra.mxu0 %v916
    %v927 = vpop.f32.mrf.mxu0
    %v928 = vadd.f32 0.0, %v927
    %v929 = vpop.f32.mrf.mxu0
    %930 = vdwg.mxu0
    %v932 = vunpack.c.l.b16 %v870
    %v933 = vpack.c.b16 %v932, %v932
    %934 = vrot.lane.b32.xlu0 %v933, 120
    %v935 = vpop.permute.xlu0 %934
    %936 = vrot.lane.b32.xlu0 %v880, 120
    %v937 = vpop.permute.xlu0 %936
    %v939 = vsel %vm210, %v935, 0
    %v942 = vsel %vm210, %v937, 0
    %944 = vmatpush.bf16.xpose.msra.mxu0 0
    %945 = vmatpush.bf16.xpose.msra.mxu0 0
    %946 = vmatpush.bf16.xpose.msra.mxu0 0
    %947 = vmatpush.bf16.xpose.msra.mxu0 0
    %948 = vmatpush.bf16.xpose.msra.mxu0 0
    %949 = vmatpush.bf16.xpose.msra.mxu0 0
    %950 = vmatpush.bf16.xpose.msra.mxu0 0
    %951 = vmatpush.bf16.xpose.msra.mxu0 %v942
    %952 = vmatmul.bf16.gmra.mxu0 %v939
    %v953 = vpop.f32.mrf.mxu0
    %v954 = vadd.f32 %v874, %v953
    %v955 = vpop.f32.mrf.mxu0
    %956 = vdwg.mxu0
    %v957 = vsel %vm448, %v954, -inf
    %958 = vmax.xlane.f32.xlu0 %v957
    %v959 = vpop.xlane.xlu0 %958
    %v960 = vsub.f32 %v954, %v959
    %v961 = vmul.f32 %v960, 1.442695
    %v962 = vpow.pop %v961
    %v963 = vsel %vm448, %v962, 0.0
    %964 = vadd.xlane.f32.xlu0 %v963
    %v965 = vpop.xlane.xlu0 %964
    %v966 = vrcp.pop %v965
    %v967 = vmul.f32 %v962, %v966
    %v968 = vpack.c.bf16 %v967, %v967
    %969 = vrot.lane.b32.xlu0 %v880, 88
    %v970 = vpop.permute.xlu0 %969
    %v973 = vsel %vm448, %v968, 0
    %975 = vmatpush.bf16.msra.mxu0 0
    %976 = vmatpush.bf16.msra.mxu0 0
    %977 = vmatpush.bf16.msra.mxu0 0
    %978 = vmatpush.bf16.msra.mxu0 0
    %979 = vmatpush.bf16.msra.mxu0 0
    %980 = vmatpush.bf16.msra.mxu0 0
    %981 = vmatpush.bf16.msra.mxu0 0
    %982 = vmatpush.bf16.msra.mxu0 %v970
    %983 = vmatmul.bf16.gmra.mxu0 %v973
    %v984 = vpop.f32.mrf.mxu0
    %v985 = vadd.f32 0.0, %v984
    %v986 = vpop.f32.mrf.mxu0
    %987 = vdwg.mxu0
    %988 = vrot.lane.b32.xlu0 %v933, 112
    %v989 = vpop.permute.xlu0 %988
    %990 = vrot.lane.b32.xlu0 %v880, 112
    %v991 = vpop.permute.xlu0 %990
    %v993 = vsel %vm210, %v989, 0
    %v996 = vsel %vm210, %v991, 0
    %998 = vmatpush.bf16.xpose.msra.mxu0 0
    %999 = vmatpush.bf16.xpose.msra.mxu0 0
    %1000 = vmatpush.bf16.xpose.msra.mxu0 0
    %1001 = vmatpush.bf16.xpose.msra.mxu0 0
    %1002 = vmatpush.bf16.xpose.msra.mxu0 0
    %1003 = vmatpush.bf16.xpose.msra.mxu0 0
    %1004 = vmatpush.bf16.xpose.msra.mxu0 0
    %1005 = vmatpush.bf16.xpose.msra.mxu0 %v996
    %1006 = vmatmul.bf16.gmra.mxu0 %v993
    %v1007 = vpop.f32.mrf.mxu0
    %v1008 = vadd.f32 %v874, %v1007
    %v1009 = vpop.f32.mrf.mxu0
    %1010 = vdwg.mxu0
    %v1011 = vsel %vm448, %v1008, -inf
    %1012 = vmax.xlane.f32.xlu0 %v1011
    %v1013 = vpop.xlane.xlu0 %1012
    %v1014 = vsub.f32 %v1008, %v1013
    %v1015 = vmul.f32 %v1014, 1.442695
    %v1016 = vpow.pop %v1015
    %v1017 = vsel %vm448, %v1016, 0.0
    %1018 = vadd.xlane.f32.xlu0 %v1017
    %v1019 = vpop.xlane.xlu0 %1018
    %v1020 = vrcp.pop %v1019
    %v1021 = vmul.f32 %v1016, %v1020
    %v1022 = vpack.c.bf16 %v1021, %v1021
    %1023 = vrot.lane.b32.xlu0 %v880, 80
    %v1024 = vpop.permute.xlu0 %1023
    %v1027 = vsel %vm448, %v1022, 0
    %1029 = vmatpush.bf16.msra.mxu0 0
    %1030 = vmatpush.bf16.msra.mxu0 0
    %1031 = vmatpush.bf16.msra.mxu0 0
    %1032 = vmatpush.bf16.msra.mxu0 0
    %1033 = vmatpush.bf16.msra.mxu0 0
    %1034 = vmatpush.bf16.msra.mxu0 0
    %1035 = vmatpush.bf16.msra.mxu0 0
    %1036 = vmatpush.bf16.msra.mxu0 %v1024
    %1037 = vmatmul.bf16.gmra.mxu0 %v1027
    %v1038 = vpop.f32.mrf.mxu0
    %v1039 = vadd.f32 0.0, %v1038
    %v1040 = vpop.f32.mrf.mxu0
    %1041 = vdwg.mxu0
    %1042 = vrot.lane.b32.xlu0 %v933, 104
    %v1043 = vpop.permute.xlu0 %1042
    %1044 = vrot.lane.b32.xlu0 %v880, 104
    %v1045 = vpop.permute.xlu0 %1044
    %v1047 = vsel %vm210, %v1043, 0
    %v1050 = vsel %vm210, %v1045, 0
    %1052 = vmatpush.bf16.xpose.msra.mxu0 0
    %1053 = vmatpush.bf16.xpose.msra.mxu0 0
    %1054 = vmatpush.bf16.xpose.msra.mxu0 0
    %1055 = vmatpush.bf16.xpose.msra.mxu0 0
    %1056 = vmatpush.bf16.xpose.msra.mxu0 0
    %1057 = vmatpush.bf16.xpose.msra.mxu0 0
    %1058 = vmatpush.bf16.xpose.msra.mxu0 0
    %1059 = vmatpush.bf16.xpose.msra.mxu0 %v1050
    %1060 = vmatmul.bf16.gmra.mxu0 %v1047
    %v1061 = vpop.f32.mrf.mxu0
    %v1062 = vadd.f32 %v874, %v1061
    %v1063 = vpop.f32.mrf.mxu0
    %1064 = vdwg.mxu0
    %v1065 = vsel %vm448, %v1062, -inf
    %1066 = vmax.xlane.f32.xlu0 %v1065
    %v1067 = vpop.xlane.xlu0 %1066
    %v1068 = vsub.f32 %v1062, %v1067
    %v1069 = vmul.f32 %v1068, 1.442695
    %v1070 = vpow.pop %v1069
    %v1071 = vsel %vm448, %v1070, 0.0
    %1072 = vadd.xlane.f32.xlu0 %v1071
    %v1073 = vpop.xlane.xlu0 %1072
    %v1074 = vrcp.pop %v1073
    %v1075 = vmul.f32 %v1070, %v1074
    %v1076 = vpack.c.bf16 %v1075, %v1075
    %1077 = vrot.lane.b32.xlu0 %v880, 72
    %v1078 = vpop.permute.xlu0 %1077
    %v1081 = vsel %vm448, %v1076, 0
    %1083 = vmatpush.bf16.msra.mxu0 0
    %1084 = vmatpush.bf16.msra.mxu0 0
    %1085 = vmatpush.bf16.msra.mxu0 0
    %1086 = vmatpush.bf16.msra.mxu0 0
    %1087 = vmatpush.bf16.msra.mxu0 0
    %1088 = vmatpush.bf16.msra.mxu0 0
    %1089 = vmatpush.bf16.msra.mxu0 0
    %1090 = vmatpush.bf16.msra.mxu0 %v1078
    %1091 = vmatmul.bf16.gmra.mxu0 %v1081
    %v1092 = vpop.f32.mrf.mxu0
    %v1093 = vadd.f32 0.0, %v1092
    %v1094 = vpop.f32.mrf.mxu0
    %1095 = vdwg.mxu0
    %1097 = vrot.lane.b32.xlu0 %v985, 8
    %v1098 = vpop.permute.xlu0 %1097
    %1101 = vrot.lane.b32.xlu0 %v1039, 16
    %v1102 = vpop.permute.xlu0 %1101
    %1105 = vrot.lane.b32.xlu0 %v1093, 24
    %v1106 = vpop.permute.xlu0 %1105
    %v1108 = vsel %vm210, %v928, %v1098
    %v1109 = vsel %vm448, %v1108, %v1102
    %v1110 = vsel %vm450, %v1109, %v1106
    %s1111 = scalar_lea.vmem %s1, 8
    %v1112 = vld [vmem:[%s1111] sm:$0xf]
    %v1113 = vld [vmem:[%s1111 + $0x4] sm:$0xf]
    %v1116 = vunpack.c.l.b16 %v1112
    %v1117 = vunpack.c.l.b16 %v1113
    %v1118 = vpack.c.b16 %v1117, %v1116
    %v1120 = vsel %vm184, %v1118, 0
    %1122 = vmatpush.bf16.msra.mxu0 0
    %1123 = vmatpush.bf16.msra.mxu0 0
    %1124 = vmatpush.bf16.msra.mxu0 0
    %1125 = vmatpush.bf16.msra.mxu0 0
    %1126 = vmatpush.bf16.msra.mxu0 0
    %1127 = vmatpush.bf16.msra.mxu0 0
    %1128 = vmatpush.bf16.msra.mxu0 %v848
    %1129 = vmatpush.bf16.msra.mxu0 %v847
    %1130 = vmatmul.bf16.gmra.mxu0 %v1120
    %v1131 = vpop.f32.mrf.mxu0
    %v1132 = vadd.f32 %v833, %v1131
    %v1133 = vpop.f32.mrf.mxu0
    %v1134 = vadd.f32 %v833, %v1133
    %1135 = vdwg.mxu0
    %s1136 = scalar_lea.vmem [#allocation5], 1
    %v1137 = vld [vmem:[%s1136] sm:$0x1]
    %v1138 = vmul.f32 %v825, 0.35355338
    %v1139 = vpack.c.bf16 %v1138, %v1138
    %v1140 = vpack.c.bf16 %v1132, %v1132
    %v1141 = vpack.c.bf16 %v1134, %v1134
    %v1143 = vperm.slane %v1137, 0
    %v1147 = vunpack.c.l.b16 %v1140
    %v1148 = vunpack.c.l.b16 %v1141
    %v1149 = vpack.c.b16 %v1148, %v1147
    %v1151 = vsel %vm210, %v1139, 0
    %v1154 = vsel %vm210, %v1149, 0
    %1156 = vmatpush.bf16.xpose.msra.mxu0 0
    %1157 = vmatpush.bf16.xpose.msra.mxu0 0
    %1158 = vmatpush.bf16.xpose.msra.mxu0 0
    %1159 = vmatpush.bf16.xpose.msra.mxu0 0
    %1160 = vmatpush.bf16.xpose.msra.mxu0 0
    %1161 = vmatpush.bf16.xpose.msra.mxu0 0
    %1162 = vmatpush.bf16.xpose.msra.mxu0 0
    %1163 = vmatpush.bf16.xpose.msra.mxu0 %v1154
    %1164 = vmatmul.bf16.gmra.mxu0 %v1151
    %v1165 = vpop.f32.mrf.mxu0
    %v1166 = vadd.f32 %v1143, %v1165
    %v1167 = vpop.f32.mrf.mxu0
    %1168 = vdwg.mxu0
    %v1169 = vsel %vm448, %v1166, -inf
    %1170 = vmax.xlane.f32.xlu0 %v1169
    %v1171 = vpop.xlane.xlu0 %1170
    %v1172 = vsub.f32 %v1166, %v1171
    %v1173 = vmul.f32 %v1172, 1.442695
    %v1174 = vpow.pop %v1173
    %v1175 = vsel %vm448, %v1174, 0.0
    %1176 = vadd.xlane.f32.xlu0 %v1175
    %v1177 = vpop.xlane.xlu0 %1176
    %v1178 = vrcp.pop %v1177
    %v1179 = vmul.f32 %v1174, %v1178
    %v1180 = vpack.c.bf16 %v1179, %v1179
    %1181 = vrot.lane.b32.xlu0 %v1149, 96
    %v1182 = vpop.permute.xlu0 %1181
    %v1185 = vsel %vm448, %v1180, 0
    %1187 = vmatpush.bf16.msra.mxu0 0
    %1188 = vmatpush.bf16.msra.mxu0 0
    %1189 = vmatpush.bf16.msra.mxu0 0
    %1190 = vmatpush.bf16.msra.mxu0 0
    %1191 = vmatpush.bf16.msra.mxu0 0
    %1192 = vmatpush.bf16.msra.mxu0 0
    %1193 = vmatpush.bf16.msra.mxu0 0
    %1194 = vmatpush.bf16.msra.mxu0 %v1182
    %1195 = vmatmul.bf16.gmra.mxu0 %v1185
    %v1196 = vpop.f32.mrf.mxu0
    %v1197 = vadd.f32 0.0, %v1196
    %v1198 = vpop.f32.mrf.mxu0
    %1199 = vdwg.mxu0
    %v1201 = vunpack.c.l.b16 %v1139
    %v1202 = vpack.c.b16 %v1201, %v1201
    %1203 = vrot.lane.b32.xlu0 %v1202, 120
    %v1204 = vpop.permute.xlu0 %1203
    %1205 = vrot.lane.b32.xlu0 %v1149, 120
    %v1206 = vpop.permute.xlu0 %1205
    %v1208 = vsel %vm210, %v1204, 0
    %v1211 = vsel %vm210, %v1206, 0
    %1213 = vmatpush.bf16.xpose.msra.mxu0 0
    %1214 = vmatpush.bf16.xpose.msra.mxu0 0
    %1215 = vmatpush.bf16.xpose.msra.mxu0 0
    %1216 = vmatpush.bf16.xpose.msra.mxu0 0
    %1217 = vmatpush.bf16.xpose.msra.mxu0 0
    %1218 = vmatpush.bf16.xpose.msra.mxu0 0
    %1219 = vmatpush.bf16.xpose.msra.mxu0 0
    %1220 = vmatpush.bf16.xpose.msra.mxu0 %v1211
    %1221 = vmatmul.bf16.gmra.mxu0 %v1208
    %v1222 = vpop.f32.mrf.mxu0
    %v1223 = vadd.f32 %v1143, %v1222
    %v1224 = vpop.f32.mrf.mxu0
    %1225 = vdwg.mxu0
    %v1226 = vsel %vm448, %v1223, -inf
    %1227 = vmax.xlane.f32.xlu0 %v1226
    %v1228 = vpop.xlane.xlu0 %1227
    %v1229 = vsub.f32 %v1223, %v1228
    %v1230 = vmul.f32 %v1229, 1.442695
    %v1231 = vpow.pop %v1230
    %v1232 = vsel %vm448, %v1231, 0.0
    %1233 = vadd.xlane.f32.xlu0 %v1232
    %v1234 = vpop.xlane.xlu0 %1233
    %v1235 = vrcp.pop %v1234
    %v1236 = vmul.f32 %v1231, %v1235
    %v1237 = vpack.c.bf16 %v1236, %v1236
    %1238 = vrot.lane.b32.xlu0 %v1149, 88
    %v1239 = vpop.permute.xlu0 %1238
    %v1242 = vsel %vm448, %v1237, 0
    %1244 = vmatpush.bf16.msra.mxu0 0
    %1245 = vmatpush.bf16.msra.mxu0 0
    %1246 = vmatpush.bf16.msra.mxu0 0
    %1247 = vmatpush.bf16.msra.mxu0 0
    %1248 = vmatpush.bf16.msra.mxu0 0
    %1249 = vmatpush.bf16.msra.mxu0 0
    %1250 = vmatpush.bf16.msra.mxu0 0
    %1251 = vmatpush.bf16.msra.mxu0 %v1239
    %1252 = vmatmul.bf16.gmra.mxu0 %v1242
    %v1253 = vpop.f32.mrf.mxu0
    %v1254 = vadd.f32 0.0, %v1253
    %v1255 = vpop.f32.mrf.mxu0
    %1256 = vdwg.mxu0
    %1257 = vrot.lane.b32.xlu0 %v1202, 112
    %v1258 = vpop.permute.xlu0 %1257
    %1259 = vrot.lane.b32.xlu0 %v1149, 112
    %v1260 = vpop.permute.xlu0 %1259
    %v1262 = vsel %vm210, %v1258, 0
    %v1265 = vsel %vm210, %v1260, 0
    %1267 = vmatpush.bf16.xpose.msra.mxu0 0
    %1268 = vmatpush.bf16.xpose.msra.mxu0 0
    %1269 = vmatpush.bf16.xpose.msra.mxu0 0
    %1270 = vmatpush.bf16.xpose.msra.mxu0 0
    %1271 = vmatpush.bf16.xpose.msra.mxu0 0
    %1272 = vmatpush.bf16.xpose.msra.mxu0 0
    %1273 = vmatpush.bf16.xpose.msra.mxu0 0
    %1274 = vmatpush.bf16.xpose.msra.mxu0 %v1265
    %1275 = vmatmul.bf16.gmra.mxu0 %v1262
    %v1276 = vpop.f32.mrf.mxu0
    %v1277 = vadd.f32 %v1143, %v1276
    %v1278 = vpop.f32.mrf.mxu0
    %1279 = vdwg.mxu0
    %v1280 = vsel %vm448, %v1277, -inf
    %1281 = vmax.xlane.f32.xlu0 %v1280
    %v1282 = vpop.xlane.xlu0 %1281
    %v1283 = vsub.f32 %v1277, %v1282
    %v1284 = vmul.f32 %v1283, 1.442695
    %v1285 = vpow.pop %v1284
    %v1286 = vsel %vm448, %v1285, 0.0
    %1287 = vadd.xlane.f32.xlu0 %v1286
    %v1288 = vpop.xlane.xlu0 %1287
    %v1289 = vrcp.pop %v1288
    %v1290 = vmul.f32 %v1285, %v1289
    %v1291 = vpack.c.bf16 %v1290, %v1290
    %1292 = vrot.lane.b32.xlu0 %v1149, 80
    %v1293 = vpop.permute.xlu0 %1292
    %v1296 = vsel %vm448, %v1291, 0
    %1298 = vmatpush.bf16.msra.mxu0 0
    %1299 = vmatpush.bf16.msra.mxu0 0
    %1300 = vmatpush.bf16.msra.mxu0 0
    %1301 = vmatpush.bf16.msra.mxu0 0
    %1302 = vmatpush.bf16.msra.mxu0 0
    %1303 = vmatpush.bf16.msra.mxu0 0
    %1304 = vmatpush.bf16.msra.mxu0 0
    %1305 = vmatpush.bf16.msra.mxu0 %v1293
    %1306 = vmatmul.bf16.gmra.mxu0 %v1296
    %v1307 = vpop.f32.mrf.mxu0
    %v1308 = vadd.f32 0.0, %v1307
    %v1309 = vpop.f32.mrf.mxu0
    %1310 = vdwg.mxu0
    %1311 = vrot.lane.b32.xlu0 %v1202, 104
    %v1312 = vpop.permute.xlu0 %1311
    %1313 = vrot.lane.b32.xlu0 %v1149, 104
    %v1314 = vpop.permute.xlu0 %1313
    %v1316 = vsel %vm210, %v1312, 0
    %v1319 = vsel %vm210, %v1314, 0
    %1321 = vmatpush.bf16.xpose.msra.mxu0 0
    %1322 = vmatpush.bf16.xpose.msra.mxu0 0
    %1323 = vmatpush.bf16.xpose.msra.mxu0 0
    %1324 = vmatpush.bf16.xpose.msra.mxu0 0
    %1325 = vmatpush.bf16.xpose.msra.mxu0 0
    %1326 = vmatpush.bf16.xpose.msra.mxu0 0
    %1327 = vmatpush.bf16.xpose.msra.mxu0 0
    %1328 = vmatpush.bf16.xpose.msra.mxu0 %v1319
    %1329 = vmatmul.bf16.gmra.mxu0 %v1316
    %v1330 = vpop.f32.mrf.mxu0
    %v1331 = vadd.f32 %v1143, %v1330
    %v1332 = vpop.f32.mrf.mxu0
    %1333 = vdwg.mxu0
    %v1334 = vsel %vm448, %v1331, -inf
    %1335 = vmax.xlane.f32.xlu0 %v1334
    %v1336 = vpop.xlane.xlu0 %1335
    %v1337 = vsub.f32 %v1331, %v1336
    %v1338 = vmul.f32 %v1337, 1.442695
    %v1339 = vpow.pop %v1338
    %v1340 = vsel %vm448, %v1339, 0.0
    %1341 = vadd.xlane.f32.xlu0 %v1340
    %v1342 = vpop.xlane.xlu0 %1341
    %v1343 = vrcp.pop %v1342
    %v1344 = vmul.f32 %v1339, %v1343
    %v1345 = vpack.c.bf16 %v1344, %v1344
    %1346 = vrot.lane.b32.xlu0 %v1149, 72
    %v1347 = vpop.permute.xlu0 %1346
    %v1350 = vsel %vm448, %v1345, 0
    %1352 = vmatpush.bf16.msra.mxu0 0
    %1353 = vmatpush.bf16.msra.mxu0 0
    %1354 = vmatpush.bf16.msra.mxu0 0
    %1355 = vmatpush.bf16.msra.mxu0 0
    %1356 = vmatpush.bf16.msra.mxu0 0
    %1357 = vmatpush.bf16.msra.mxu0 0
    %1358 = vmatpush.bf16.msra.mxu0 0
    %1359 = vmatpush.bf16.msra.mxu0 %v1347
    %1360 = vmatmul.bf16.gmra.mxu0 %v1350
    %v1361 = vpop.f32.mrf.mxu0
    %v1362 = vadd.f32 0.0, %v1361
    %v1363 = vpop.f32.mrf.mxu0
    %1364 = vdwg.mxu0
    %1366 = vrot.lane.b32.xlu0 %v1254, 8
    %v1367 = vpop.permute.xlu0 %1366
    %1370 = vrot.lane.b32.xlu0 %v1308, 16
    %v1371 = vpop.permute.xlu0 %1370
    %1374 = vrot.lane.b32.xlu0 %v1362, 24
    %v1375 = vpop.permute.xlu0 %1374
    %v1377 = vsel %vm210, %v1197, %v1367
    %v1378 = vsel %vm448, %v1377, %v1371
    %v1379 = vsel %vm450, %v1378, %v1375
    %v1380 = vpack.c.bf16 %v1379, %v1110
    %v1381 = vld [vmem:[#allocation10] sm:$0xf]
    %v1382 = vld [vmem:[#allocation10 + $0x4] sm:$0xf]
    %v1383 = vld [vmem:[#allocation10 + $0x8] sm:$0xf]
    %v1384 = vld [vmem:[#allocation10 + $0xc] sm:$0xf]
    %v1385 = vperm.slane %v155, 0
    %v1390 = vunpack.c.l.b16 %v1381
    %v1391 = vunpack.c.l.b16 %v1382
    %v1392 = vunpack.c.l.b16 %v1383
    %v1393 = vunpack.c.l.b16 %v1384
    %v1394 = vpack.c.b16 %v1391, %v1390
    %v1395 = vpack.c.b16 %v1393, %v1392
    %v1399 = vsel %vm184, %v1380, 0
    %1401 = vmatpush.bf16.msra.mxu0 0
    %1402 = vmatpush.bf16.msra.mxu0 0
    %1403 = vmatpush.bf16.msra.mxu0 0
    %1404 = vmatpush.bf16.msra.mxu0 0
    %1405 = vmatpush.bf16.msra.mxu0 0
    %1406 = vmatpush.bf16.msra.mxu0 0
    %1407 = vmatpush.bf16.msra.mxu0 %v1395
    %1408 = vmatpush.bf16.msra.mxu0 %v1394
    %1409 = vmatmul.bf16.gmra.mxu0 %v1399
    %v1410 = vpop.f32.mrf.mxu0
    %v1411 = vadd.f32 %v1385, %v1410
    %v1412 = vpop.f32.mrf.mxu0
    %v1413 = vadd.f32 %v1385, %v1412
    %1414 = vdwg.mxu0
    %v1415 = vadd.f32 %v1411, %v790
    %v1416 = vadd.f32 %v1413, %v791
    %v1417 = vsel %vm184, %v1415, 0.0
    %1418 = vadd.xlane.f32.xlu0 %v1417
    %v1419 = vpop.xlane.xlu0 %1418
    %v1420 = vsel %vm184, %v1416, 0.0
    %1421 = vadd.xlane.f32.xlu0 %v1420
    %v1422 = vpop.xlane.xlu0 %1421
    %v1423 = vmul.f32 %v1419, %v747
    %v1424 = vmul.f32 %v1422, %v747
    %v1425 = vsub.f32 %v1415, %v1423
    %v1426 = vsub.f32 %v1416, %v1424
    %v1427 = vmul.f32 %v1425, %v1425
    %v1428 = vmul.f32 %v1426, %v1426
    %v1429 = vsel %vm184, %v1427, 0.0
    %1430 = vadd.xlane.f32.xlu0 %v1429
    %v1431 = vpop.xlane.xlu0 %1430
    %v1432 = vsel %vm184, %v1428, 0.0
    %1433 = vadd.xlane.f32.xlu0 %v1432
    %v1434 = vpop.xlane.xlu0 %1433
    %v1435 = vmul.f32 %v1431, %v747
    %v1436 = vmul.f32 %v1434, %v747
    %v1437 = vadd.f32 %v1435, 1e-12
    %v1438 = vadd.f32 %v1436, 1e-12
    %v1439 = vrsqrt.pop %v1437
    %v1440 = vmul.f32 %v1439, %v1437
    %v1441 = vmul.f32 %v1440, %v1439
    %v1442 = vmul.f32 0.5, %v1441
    %v1443 = vsub.f32 1.5, %v1442
    %v1444 = vmul.f32 %v1439, %v1443
    %vm1445 = vweird.f32 %v1437
    %vm1446 = vweird.f32 %v1439
    %vm1447 = vmor %vm1445, %vm1446
    %v1448 = vsel %vm1447, %v1439, %v1444
    %v1449 = vrsqrt.pop %v1438
    %v1450 = vmul.f32 %v1449, %v1438
    %v1451 = vmul.f32 %v1450, %v1449
    %v1452 = vmul.f32 0.5, %v1451
    %v1453 = vsub.f32 1.5, %v1452
    %v1454 = vmul.f32 %v1449, %v1453
    %vm1455 = vweird.f32 %v1438
    %vm1456 = vweird.f32 %v1449
    %vm1457 = vmor %vm1455, %vm1456
    %v1458 = vsel %vm1457, %v1449, %v1454
    %v1459 = vmul.f32 %v1425, %v1448
    %v1460 = vmul.f32 %v1426, %v1458
    %v1461 = vperm.slane %v156, 0
    %v1462 = vmul.f32 %v1459, %v1461
    %v1463 = vmul.f32 %v1460, %v1461
    %v1464 = vperm.slane %v157, 0
    %v1465 = vadd.f32 %v1462, %v1464
    %v1466 = vadd.f32 %v1463, %v1464
    %v1467 = vpack.c.bf16 %v1466, %v1465
    %v1468 = vld [vmem:[#allocation11] sm:$0xf]
    %v1469 = vld [vmem:[#allocation11 + $0x4] sm:$0xf]
    %v1470 = vld [vmem:[#allocation11 + $0x8] sm:$0xf]
    %v1471 = vld [vmem:[#allocation11 + $0xc] sm:$0xf]
    %v1472 = vperm.slane %v158, 0
    %v1477 = vunpack.c.l.b16 %v1468
    %v1478 = vunpack.c.l.b16 %v1469
    %v1479 = vunpack.c.l.b16 %v1470
    %v1480 = vunpack.c.l.b16 %v1471
    %v1481 = vpack.c.b16 %v1478, %v1477
    %v1482 = vpack.c.b16 %v1480, %v1479
    %v1486 = vsel %vm184, %v1467, 0
    %1488 = vmatpush.bf16.msra.mxu0 0
    %1489 = vmatpush.bf16.msra.mxu0 0
    %1490 = vmatpush.bf16.msra.mxu0 0
    %1491 = vmatpush.bf16.msra.mxu0 0
    %1492 = vmatpush.bf16.msra.mxu0 0
    %1493 = vmatpush.bf16.msra.mxu0 0
    %1494 = vmatpush.bf16.msra.mxu0 %v1482
    %1495 = vmatpush.bf16.msra.mxu0 %v1481
    %1496 = vmatmul.bf16.gmra.mxu0 %v1486
    %v1497 = vpop.f32.mrf.mxu0
    %v1498 = vadd.f32 %v1472, %v1497
    %v1499 = vpop.f32.mrf.mxu0
    %v1500 = vadd.f32 %v1472, %v1499
    %1501 = vdwg.mxu0
    %v1502 = vmul.f32 %v1498, 0.5
    %v1503 = vmul.f32 %v1500, 0.5
    %v1504 = vmul.f32 %v1498, 0.044715
    %v1505 = vmul.f32 %v1500, 0.044715
    %v1506 = vmul.f32 %v1504, %v1498
    %v1507 = vmul.f32 %v1505, %v1500
    %v1508 = vmul.f32 %v1506, %v1498
    %v1509 = vmul.f32 %v1507, %v1500
    %v1510 = vadd.f32 %v1498, %v1508
    %v1511 = vadd.f32 %v1500, %v1509
    %v1512 = vmul.f32 %v1510, 0.7978846
    %v1513 = vmul.f32 %v1511, 0.7978846
    %v1514 = vtanh.pop %v1512
    %v1515 = vtanh.pop %v1513
    %v1516 = vadd.f32 %v1514, 1.0
    %v1517 = vadd.f32 %v1515, 1.0
    %v1518 = vmul.f32 %v1502, %v1516
    %v1519 = vmul.f32 %v1503, %v1517
    %v1520 = vpack.c.bf16 %v1519, %v1518
    %v1521 = vld [vmem:[%s9] sm:$0xf]
    %v1522 = vld [vmem:[%s9 + $0x4] sm:$0xf]
    %v1523 = vld [vmem:[%s9 + $0x8] sm:$0xf]
    %v1524 = vld [vmem:[%s9 + $0xc] sm:$0xf]
    %v1525 = vld [vmem:[%s9 + $0x10] sm:$0xf]
    %v1526 = vld [vmem:[%s9 + $0x14] sm:$0xf]
    %v1527 = vld [vmem:[%s9 + $0x18] sm:$0xf]
    %v1528 = vld [vmem:[%s9 + $0x1c] sm:$0xf]
    %v1529 = vperm.slane %v159, 0
    %v1538 = vunpack.c.l.b16 %v1521
    %v1539 = vunpack.c.l.b16 %v1522
    %v1540 = vunpack.c.l.b16 %v1523
    %v1541 = vunpack.c.l.b16 %v1524
    %v1542 = vunpack.c.l.b16 %v1525
    %v1543 = vunpack.c.l.b16 %v1526
    %v1544 = vunpack.c.l.b16 %v1527
    %v1545 = vunpack.c.l.b16 %v1528
    %v1546 = vpack.c.b16 %v1539, %v1538
    %v1547 = vpack.c.b16 %v1541, %v1540
    %v1548 = vpack.c.b16 %v1543, %v1542
    %v1549 = vpack.c.b16 %v1545, %v1544
    %vm1554 = vcmask 523264
    %v1556 = vsel %vm1554, %v1520, 0
    %1558 = vmatpush.bf16.msra.mxu0 0
    %1559 = vmatpush.bf16.msra.mxu0 0
    %1560 = vmatpush.bf16.msra.mxu0 0
    %1561 = vmatpush.bf16.msra.mxu0 0
    %1562 = vmatpush.bf16.msra.mxu0 %v1549
    %1563 = vmatpush.bf16.msra.mxu0 %v1548
    %1564 = vmatpush.bf16.msra.mxu0 %v1547
    %1565 = vmatpush.bf16.msra.mxu0 %v1546
    %1566 = vmatmul.bf16.gmra.mxu0 %v1556
    %v1567 = vpop.f32.mrf.mxu0
    %v1568 = vadd.f32 %v1529, %v1567
    %v1569 = vpop.f32.mrf.mxu0
    %v1570 = vadd.f32 %v1529, %v1569
    %1571 = vdwg.mxu0
    %v1572 = vadd.f32 %v1568, %v1465
    %v1573 = vadd.f32 %v1570, %v1466
    %v1574 = vsel %vm184, %v1572, 0.0
    %1575 = vadd.xlane.f32.xlu0 %v1574
    %v1576 = vpop.xlane.xlu0 %1575
    %v1577 = vsel %vm184, %v1573, 0.0
    %1578 = vadd.xlane.f32.xlu0 %v1577
    %v1579 = vpop.xlane.xlu0 %1578
    %v1580 = vmul.f32 %v1576, %v747
    %v1581 = vmul.f32 %v1579, %v747
    %v1582 = vsub.f32 %v1572, %v1580
    %v1583 = vsub.f32 %v1573, %v1581
    %v1584 = vmul.f32 %v1582, %v1582
    %v1585 = vmul.f32 %v1583, %v1583
    %v1586 = vsel %vm184, %v1584, 0.0
    %1587 = vadd.xlane.f32.xlu0 %v1586
    %v1588 = vpop.xlane.xlu0 %1587
    %v1589 = vsel %vm184, %v1585, 0.0
    %1590 = vadd.xlane.f32.xlu0 %v1589
    %v1591 = vpop.xlane.xlu0 %1590
    %v1592 = vmul.f32 %v1588, %v747
    %v1593 = vmul.f32 %v1591, %v747
    %v1594 = vadd.f32 %v1592, 1e-12
    %v1595 = vadd.f32 %v1593, 1e-12
    %v1596 = vrsqrt.pop %v1594
    %v1597 = vmul.f32 %v1596, %v1594
    %v1598 = vmul.f32 %v1597, %v1596
    %v1599 = vmul.f32 0.5, %v1598
    %v1600 = vsub.f32 1.5, %v1599
    %v1601 = vmul.f32 %v1596, %v1600
    %vm1602 = vweird.f32 %v1594
    %vm1603 = vweird.f32 %v1596
    %vm1604 = vmor %vm1602, %vm1603
    %v1605 = vsel %vm1604, %v1596, %v1601
    %v1606 = vrsqrt.pop %v1595
    %v1607 = vmul.f32 %v1606, %v1595
    %v1608 = vmul.f32 %v1607, %v1606
    %v1609 = vmul.f32 0.5, %v1608
    %v1610 = vsub.f32 1.5, %v1609
    %v1611 = vmul.f32 %v1606, %v1610
    %vm1612 = vweird.f32 %v1595
    %vm1613 = vweird.f32 %v1606
    %vm1614 = vmor %vm1612, %vm1613
    %v1615 = vsel %vm1614, %v1606, %v1611
    %v1616 = vmul.f32 %v1582, %v1605
    %v1617 = vmul.f32 %v1583, %v1615
    %v1618 = vperm.slane %v160, 0
    %v1619 = vmul.f32 %v1616, %v1618
    %v1620 = vmul.f32 %v1617, %v1618
    %v1621 = vperm.slane %v161, 0
    %v1622 = vadd.f32 %v1619, %v1621
    %v1623 = vadd.f32 %v1620, %v1621
    %v1624 = vpack.c.bf16 %v1622, %v1622
    %v1625 = vpack.c.bf16 %v1623, %v1623
    %vm1626 = vcmask 257024
    %1627 = vst.msk [vmem:[#allocation14] sm:$0xf] %vm1626, %v1624
    %1628 = vst.msk [vmem:[#allocation14 + $0x4] sm:$0xf] %vm1626, %v1625
    // Predicated region
    $region74: #{tpu_custom_call.1} parent=1 // pred_check
      _
    $region75: #{tpu_custom_call.1} parent=1 // pred_check_branch
      %1630 = sbr.rel (0) target = $region77
    $region76: #{tpu_custom_call.1} parent=1 // pred_region
      %1632 = vsyncadd [#allocation4], 0
      %s1633 = sshll.u32 [#allocation14], 4
      %s1634 = int_to_ptr.vmem [resolvable:$true] %s1633
      %s1635 = sshll.u32 %s11, 4
      %s1636 = int_to_ptr.hbm [resolvable:$true] %s1635
      %1641 = dma.vmem_to_hbm [thread:$0]  %s1634, 128, %s1636, [#allocation4], 64, 64, 4
    $region77: #{tpu_custom_call.1} parent=1 // pred_fallthru
      _
    // Predicated region
    $region78: #{tpu_custom_call.1} parent=1 // pred_check
      _
    $region79: #{tpu_custom_call.1} parent=1 // pred_check_branch
      %1643 = sbr.rel (0) target = $region81
    $region80: #{tpu_custom_call.1} parent=1 // pred_region
      %1645 = dma.done [#allocation4], 128
    $region81: #{tpu_custom_call.1} parent=1 // pred_fallthru
      _
    %1646 = vsyncpa [#allocation3], 1
    %1647 = vsyncpa [#allocation6], 1
    %1648 = vsyncpa [#allocation9], 1
    %1649 = vsyncpa [#allocation12], 1
    %1650 = vsyncpa [#allocation4], 1

</llo_original>
